<compile_context>
chip_gen: v5e
topology: v5e:2x2
jax: 0.10.0
libtpu: 0.0.40
codegen_flags: <defaults>
</compile_context>

<pallas_src>
import jax
import jax.numpy as jnp
from jax.experimental import pallas as pl
from jax.experimental.pallas import tpu as pltpu


def _round_up(x, m):
    return (x + m - 1) // m * m


def _const_spec(shape):
    """Constant-index BlockSpec, single-buffered when the API supports it."""
    idx = lambda b, c: (0,) * len(shape)
    try:
        return pl.BlockSpec(shape, idx, pipeline_mode=pl.Buffered(1))
    except TypeError:  # older jax without pipeline_mode kwarg
        return pl.BlockSpec(shape, idx)


def _gru_kernel(len_ref, gx_ref, whh_ref, bhh_ref, wfc_ref, bfc_ref,
                out_ref, h_ref):
    """Grid = (batch_tile, time_chunk); one step == Tc GRU timesteps.

    len_ref : (Bt, 1)        int32  valid lengths (0 for padded batch rows)
    gx_ref  : (Tc, Bt, 3Hp)  bf16   precomputed x @ W_ih^T + b_ih (gate-padded)
    whh_ref : (Hp, 3Hp)      bf16   W_hh^T (r|z|n gates at 128-aligned columns)
    bhh_ref : (1, 3Hp)       f32    b_hh (gate-padded)
    wfc_ref : (1, Hp)        f32    fc1 weight (row layout for VPU reduce)
    bfc_ref : (1, 1)         f32    fc1 bias
    out_ref : (Bt, 1)        f32    sigmoid(fc1(h_final))
    h_ref   : (Bt, Hp)       f32    VMEM scratch; hidden state carried over time
    """
    c = pl.program_id(1)                 # time-chunk axis (serial recurrence)
    t_chunk = gx_ref.shape[0]
    hp = h_ref.shape[1]

    @pl.when(c == 0)
    def _():
        h_ref[...] = jnp.zeros_like(h_ref)

    whh = whh_ref[...]                   # (Hp, 3Hp) bf16
    bhh = bhh_ref[...]                   # (1, 3Hp)  f32
    lens = len_ref[...]                  # (Bt, 1)   int32
    t0 = c * t_chunk

    def step(i, h_prev):
        # h_prev: (Bt, Hp) f32. NOTE: h is cast to bf16 only at the MXU input;
        # accumulation and the carried state stay f32 (drift-safe for long T).
        gx = gx_ref[i].astype(jnp.float32)                       # (Bt, 3Hp)
        gh = jnp.dot(h_prev.astype(jnp.bfloat16), whh,
                     preferred_element_type=jnp.float32) + bhh
        # PyTorch gate order r, z, n; n = tanh(gx_n + r * (W_hn h + b_hn)).
        r = jax.nn.sigmoid(gx[:, 0:hp] + gh[:, 0:hp])
        z = jax.nn.sigmoid(gx[:, hp:2 * hp] + gh[:, hp:2 * hp])
        n = jnp.tanh(gx[:, 2 * hp:3 * hp] + r * gh[:, 2 * hp:3 * hp])
        h_new = (1.0 - z) * n + z * h_prev
        # pack_padded_sequence semantics: h freezes once t >= lengths[b].
        mask = (t0 + i) < lens                                   # (Bt, 1) bool
        return jnp.where(mask, h_new, h_prev)

    h_ref[...] = jax.lax.fori_loop(0, t_chunk, step, h_ref[...], unroll=8)

    @pl.when(c == pl.num_programs(1) - 1)
    def _():
        # fc1 has a single output unit: VPU multiply + lane reduction instead
        # of a degenerate (Bt,Hp)@(Hp,1) MXU pass with a 1-lane masked store.
        h = h_ref[...]
        logits = jnp.sum(h * wfc_ref[...], axis=1, keepdims=True) + bfc_ref[...]
        out_ref[...] = jax.nn.sigmoid(logits)


def rnn_forward(tokens, lengths, params):
    """tokens: (T, B) int32, lengths: (B,) int32. Returns (1, B, 1) f32."""
    emb = params["embedding"]                    # (V, E)
    w_ih = params["w_ih"]                        # (3H, E)
    w_hh = params["w_hh"]                        # (3H, H)
    b_ih = params["b_ih"]                        # (3H,)
    b_hh = params["b_hh"]                        # (3H,)
    w_fc = params["w_fc"]                        # (1, H)
    b_fc = params["b_fc"]                        # (1,)

    T, B = tokens.shape
    H = w_hh.shape[1]
    E = emb.shape[1]

    # ---- padded / aligned sizes ---------------------------------------------
    bp = _round_up(max(B, 8), 8)                 # sublane multiple
    hp = _round_up(max(H, 128), 128)             # lane multiple -> aligned gates

    # Batch-tile split across TensorCores (v7x has 2 TCs). Only split when each
    # core still gets a reasonably MXU-filling M (>=128 rows); never shard H.
    if bp >= 256:
        bp = _round_up(bp, 16)
        n_bt = 2
    else:
        n_bt = 1
    bt = bp // n_bt

    # ---- generation-aware VMEM budget -> time chunk size ---------------------
    try:
        vmem_cap = int(pltpu.get_tpu_info().vmem_capacity_bytes)
    except Exception:
        vmem_cap = 64 * 1024 * 1024              # conservative fallback
    usable = int(0.75 * vmem_cap)                # ~48 MiB v7x, ~96 MiB v5e/v6e

    fixed_bytes = (
        1 * hp * 3 * hp * 2                      # W_hh^T bf16, single-buffered
        + 3 * hp * 4 + hp * 4 + 4                # b_hh, W_fc row, b_fc (f32)
        + 2 * bt * 4 + 2 * bt * 4                # lengths + output (tiny)
        + bt * hp * 4                            # h scratch (f32)
    )
    per_tc = 2 * bt * 3 * hp * 2                 # gx chunk, bf16, double-buffered
    tc_max = max(1, (usable - fixed_bytes) // per_tc)
    tc = int(max(1, min(T, tc_max, 256)))        # timesteps per grid step
    tp = _round_up(T, tc)
    n_chunks = tp // tc

    vmem_limit = int(min(vmem_cap,
                         max(8 * 1024 * 1024, fixed_bytes + per_tc * tc
                             + 4 * 1024 * 1024)))

    # ---- gate-aligned padding on the TINY weights ----------------------------
    # Gate g of W_ih / W_hh^T / b_* is placed at 128-aligned column g*hp, so the
    # big gx slab comes out of the einsum already in the padded layout.
    wih_pad = jnp.zeros((3 * hp, E), jnp.float32)
    bih_pad = jnp.zeros((3 * hp,), jnp.float32)
    whh_pad = jnp.zeros((hp, 3 * hp), jnp.float32)
    bhh_pad = jnp.zeros((1, 3 * hp), jnp.float32)
    whh_t = w_hh.T.astype(jnp.float32)           # (H, 3H)
    for g in range(3):
        wih_pad = wih_pad.at[g * hp:g * hp + H, :].set(w_ih[g * H:(g + 1) * H, :])
        bih_pad = bih_pad.at[g * hp:g * hp + H].set(b_ih[g * H:(g + 1) * H])
        whh_pad = whh_pad.at[:H, g * hp:g * hp + H].set(whh_t[:, g * H:(g + 1) * H])
        bhh_pad = bhh_pad.at[0, g * hp:g * hp + H].set(b_hh[g * H:(g + 1) * H])
    whh_pad = whh_pad.astype(jnp.bfloat16)       # bf16 MXU operand, f32 accumulate

    # ---- embedding lookup + hoisted input-side GEMM (bf16, one pass) ---------
    # Pad the token ids (cheap) so gx is born at (tp, bp, 3hp); padded rows /
    # timesteps are neutralized by the length mask in-kernel.
    tok_pad = jnp.zeros((tp, bp), jnp.int32).at[:T, :B].set(tokens)
    x_emb = jnp.take(emb.astype(jnp.bfloat16), tok_pad, axis=0)      # (tp, bp, E)
    gx_pad = (jnp.einsum("tbe,ge->tbg", x_emb, wih_pad.astype(jnp.bfloat16),
                         preferred_element_type=jnp.float32)
              + bih_pad).astype(jnp.bfloat16)                        # (tp, bp, 3hp)

    wfc_row = jnp.zeros((1, hp), jnp.float32).at[0, :H].set(
        w_fc[0].astype(jnp.float32))
    bfc_2d = b_fc.reshape(1, 1).astype(jnp.float32)
    len_pad = jnp.zeros((bp, 1), jnp.int32).at[:B, 0].set(lengths.astype(jnp.int32))

    out = pl.pallas_call(
        _gru_kernel,
        out_shape=jax.ShapeDtypeStruct((bp, 1), jnp.float32),
        grid_spec=pltpu.PrefetchScalarGridSpec(
            num_scalar_prefetch=0,
            grid=(n_bt, n_chunks),
            in_specs=[
                pl.BlockSpec((bt, 1), lambda b, c: (b, 0)),              # lengths
                pl.BlockSpec((tc, bt, 3 * hp), lambda b, c: (c, b, 0)),  # gx chunk
                _const_spec((hp, 3 * hp)),                               # W_hh^T
                _const_spec((1, 3 * hp)),                                # b_hh
                _const_spec((1, hp)),                                    # W_fc row
                _const_spec((1, 1)),                                     # b_fc
            ],
            out_specs=pl.BlockSpec((bt, 1), lambda b, c: (b, 0)),
            scratch_shapes=[pltpu.VMEM((bt, hp), jnp.float32)],
        ),
        compiler_params=pltpu.CompilerParams(
            # Batch tiles are independent recurrences (megacore on v7x);
            # the time axis is the serial recurrence.
            dimension_semantics=("parallel", "arbitrary"),
            vmem_limit_bytes=vmem_limit,
        ),
    )(len_pad, gx_pad, whh_pad, bhh_pad, wfc_row, bfc_2d)

    return out[:B].reshape(1, B, 1)              # matches sigmoid(fc1(h_n))


def make_params(key, vocab_size, embedding_dim, hidden_dim):
    ks = jax.random.split(key, 7)
    s = 0.1
    return {
        "embedding": jax.random.normal(ks[0], (vocab_size, embedding_dim), jnp.float32),
        "w_ih": s * jax.random.normal(ks[1], (3 * hidden_dim, embedding_dim), jnp.float32),
        "w_hh": s * jax.random.normal(ks[2], (3 * hidden_dim, hidden_dim), jnp.float32),
        "b_ih": s * jax.random.normal(ks[3], (3 * hidden_dim,), jnp.float32),
        "b_hh": s * jax.random.normal(ks[4], (3 * hidden_dim,), jnp.float32),
        "w_fc": s * jax.random.normal(ks[5], (1, hidden_dim), jnp.float32),
        "b_fc": s * jax.random.normal(ks[6], (1,), jnp.float32),
    }


if __name__ == "__main__":
    VOCAB, E, H = 50, 16, 32
    T, B = 8, 4

    key = jax.random.PRNGKey(0)
    k_par, k_tok = jax.random.split(key)
    params = make_params(k_par, VOCAB, E, H)

    tokens = jax.random.randint(k_tok, (T, B), 0, VOCAB, dtype=jnp.int32)
    # pack_padded_sequence expects lengths sorted descending by default.
    lengths = jnp.array([8, 6, 5, 3], dtype=jnp.int32)

    out = jax.jit(rnn_forward)(tokens, lengths, params)
    jax.block_until_ready(out)

    assert out.shape == (1, B, 1)
    assert bool(jnp.all(jnp.isfinite(out)))
    print("KERNEL_OK")
</pallas_src>

<mosaic_0001>
module attributes {stable_mosaic.version = 11 : i64} {
  func.func @_gru_kernel(%arg0: i32, %arg1: i32, %arg2: memref<8x1xi32, #tpu.memory_space<vmem>>, %arg3: memref<8x8x384xbf16, #tpu.memory_space<vmem>>, %arg4: memref<128x384xbf16, #tpu.memory_space<vmem>>, %arg5: memref<1x384xf32, #tpu.memory_space<vmem>>, %arg6: memref<1x128xf32, #tpu.memory_space<vmem>>, %arg7: memref<1x1xf32, #tpu.memory_space<vmem>>, %arg8: memref<8x1xf32, #tpu.memory_space<vmem>>, %arg9: memref<8x128xf32, #tpu.memory_space<vmem>>) attributes {dimension_semantics = [#tpu.dimension_semantics<parallel>, #tpu.dimension_semantics<arbitrary>], iteration_bounds = array<i64: 1, 1>, scalar_prefetch = 0 : i64, scratch_operands = 1 : i64, tpu.core_type = #tpu.core_type<tc>, window_params = [{transform_indices = @transform_0, window_bounds = array<i64: 8, 1>}, {transform_indices = @transform_1, window_bounds = array<i64: 8, 8, 384>}, {pipeline_mode = #tpu.pipeline_mode<synchronous>, transform_indices = @transform_2, window_bounds = array<i64: 128, 384>}, {pipeline_mode = #tpu.pipeline_mode<synchronous>, transform_indices = @transform_3, window_bounds = array<i64: 1, 384>}, {pipeline_mode = #tpu.pipeline_mode<synchronous>, transform_indices = @transform_4, window_bounds = array<i64: 1, 128>}, {pipeline_mode = #tpu.pipeline_mode<synchronous>, transform_indices = @transform_5, window_bounds = array<i64: 1, 1>}, {transform_indices = @transform_6, window_bounds = array<i64: 8, 1>}]} {
    %c0_i32 = arith.constant 0 : i32
    %0 = arith.cmpi eq, %arg1, %c0_i32 : i32
    %1 = arith.extui %0 : i1 to i32
    %c0_i32_0 = arith.constant 0 : i32
    %2 = arith.cmpi ne, %1, %c0_i32_0 : i32
    scf.if %2 {
      %cst_61 = arith.constant 0.000000e+00 : f32
      %332 = vector.broadcast %cst_61 : f32 to vector<8x128xf32>
      %c0_62 = arith.constant 0 : index
      %c0_63 = arith.constant 0 : index
      %333 = vector.load %arg9[%c0_62, %c0_63] : memref<8x128xf32, #tpu.memory_space<vmem>>, vector<8x128xf32>
      tpu.vector_store %arg9[%c0_62, %c0_63], %332 {strides = array<i32>} : memref<8x128xf32, #tpu.memory_space<vmem>>, vector<8x128xf32>,
    } else {
    }
    %c0 = arith.constant 0 : index
    %c0_1 = arith.constant 0 : index
    %3 = vector.load %arg4[%c0, %c0_1] : memref<128x384xbf16, #tpu.memory_space<vmem>>, vector<128x384xbf16>
    %c0_2 = arith.constant 0 : index
    %c0_3 = arith.constant 0 : index
    %4 = vector.load %arg5[%c0_2, %c0_3] : memref<1x384xf32, #tpu.memory_space<vmem>>, vector<1x384xf32>
    %c0_4 = arith.constant 0 : index
    %c0_5 = arith.constant 0 : index
    %5 = vector.load %arg2[%c0_4, %c0_5] : memref<8x1xi32, #tpu.memory_space<vmem>>, vector<8x1xi32>
    %c8_i32 = arith.constant 8 : i32
    %6 = arith.muli %arg1, %c8_i32 : i32
    %c0_6 = arith.constant 0 : index
    %c0_7 = arith.constant 0 : index
    %7 = vector.load %arg9[%c0_6, %c0_7] : memref<8x128xf32, #tpu.memory_space<vmem>>, vector<8x128xf32>
    %c0_i32_8 = arith.constant 0 : i32
    %8 = arith.index_cast %c0_i32_8 : i32 to index
    %c0_9 = arith.constant 0 : index
    %c0_10 = arith.constant 0 : index
    %9 = vector.load %arg3[%8, %c0_9, %c0_10] : memref<8x8x384xbf16, #tpu.memory_space<vmem>>, vector<1x8x384xbf16>
    %10 = vector.shape_cast %9 : vector<1x8x384xbf16> to vector<8x384xbf16>
    %11 = arith.extf %10 : vector<8x384xbf16> to vector<8x384xf32>
    %12 = arith.truncf %7 : vector<8x128xf32> to vector<8x128xbf16>
    %cst = arith.constant dense<0.000000e+00> : vector<8x384xf32>
    %13 = tpu.matmul %12, %3, %cst {dimension_numbers = #tpu.dot_dimension_numbers<[1], [0], [0], [1], [0, 0, 1, 1], [], []>} : vector<8x128xbf16>, vector<128x384xbf16>, vector<8x384xf32> -> vector<8x384xf32>
    %14 = vector.broadcast %4 : vector<1x384xf32> to vector<8x384xf32>
    %15 = arith.addf %13, %14 : vector<8x384xf32>
    %16 = vector.extract_strided_slice %11 {offsets = [0, 0], sizes = [8, 128], strides = [1, 1]} : vector<8x384xf32> to vector<8x128xf32>
    %17 = vector.extract_strided_slice %15 {offsets = [0, 0], sizes = [8, 128], strides = [1, 1]} : vector<8x384xf32> to vector<8x128xf32>
    %18 = arith.addf %16, %17 : vector<8x128xf32>
    %19 = arith.negf %18 : vector<8x128xf32>
    %20 = math.exp %19 : vector<8x128xf32>
    %cst_11 = arith.constant 1.000000e+00 : f32
    %21 = vector.broadcast %cst_11 : f32 to vector<8x128xf32>
    %22 = arith.addf %21, %20 : vector<8x128xf32>
    %23 = arith.divf %21, %22 : vector<8x128xf32>
    %24 = vector.extract_strided_slice %11 {offsets = [0, 128], sizes = [8, 128], strides = [1, 1]} : vector<8x384xf32> to vector<8x128xf32>
    %25 = vector.extract_strided_slice %15 {offsets = [0, 128], sizes = [8, 128], strides = [1, 1]} : vector<8x384xf32> to vector<8x128xf32>
    %26 = arith.addf %24, %25 : vector<8x128xf32>
    %27 = arith.negf %26 : vector<8x128xf32>
    %28 = math.exp %27 : vector<8x128xf32>
    %cst_12 = arith.constant 1.000000e+00 : f32
    %29 = vector.broadcast %cst_12 : f32 to vector<8x128xf32>
    %30 = arith.addf %29, %28 : vector<8x128xf32>
    %31 = arith.divf %29, %30 : vector<8x128xf32>
    %32 = vector.extract_strided_slice %11 {offsets = [0, 256], sizes = [8, 128], strides = [1, 1]} : vector<8x384xf32> to vector<8x128xf32>
    %33 = vector.extract_strided_slice %15 {offsets = [0, 256], sizes = [8, 128], strides = [1, 1]} : vector<8x384xf32> to vector<8x128xf32>
    %34 = arith.mulf %23, %33 : vector<8x128xf32>
    %35 = arith.addf %32, %34 : vector<8x128xf32>
    %36 = math.tanh %35 : vector<8x128xf32>
    %cst_13 = arith.constant 1.000000e+00 : f32
    %37 = vector.broadcast %cst_13 : f32 to vector<8x128xf32>
    %38 = arith.subf %37, %31 : vector<8x128xf32>
    %39 = arith.mulf %38, %36 : vector<8x128xf32>
    %40 = arith.mulf %31, %7 : vector<8x128xf32>
    %41 = arith.addf %39, %40 : vector<8x128xf32>
    %42 = arith.addi %6, %c0_i32_8 : i32
    %43 = vector.broadcast %42 : i32 to vector<8x1xi32>
    %44 = arith.cmpi slt, %43, %5 : vector<8x1xi32>
    %45 = vector.shape_cast %44 : vector<8x1xi1> to vector<8x1xi1>
    %46 = vector.broadcast %45 : vector<8x1xi1> to vector<8x128xi1>
    %47 = arith.select %46, %41, %7 : vector<8x128xi1>, vector<8x128xf32>
    %c1_i32 = arith.constant 1 : i32
    %48 = arith.index_cast %c1_i32 : i32 to index
    %c0_14 = arith.constant 0 : index
    %c0_15 = arith.constant 0 : index
    %49 = vector.load %arg3[%48, %c0_14, %c0_15] : memref<8x8x384xbf16, #tpu.memory_space<vmem>>, vector<1x8x384xbf16>
    %50 = vector.shape_cast %49 : vector<1x8x384xbf16> to vector<8x384xbf16>
    %51 = arith.extf %50 : vector<8x384xbf16> to vector<8x384xf32>
    %52 = arith.truncf %47 : vector<8x128xf32> to vector<8x128xbf16>
    %cst_16 = arith.constant dense<0.000000e+00> : vector<8x384xf32>
    %53 = tpu.matmul %52, %3, %cst_16 {dimension_numbers = #tpu.dot_dimension_numbers<[1], [0], [0], [1], [0, 0, 1, 1], [], []>} : vector<8x128xbf16>, vector<128x384xbf16>, vector<8x384xf32> -> vector<8x384xf32>
    %54 = vector.broadcast %4 : vector<1x384xf32> to vector<8x384xf32>
    %55 = arith.addf %53, %54 : vector<8x384xf32>
    %56 = vector.extract_strided_slice %51 {offsets = [0, 0], sizes = [8, 128], strides = [1, 1]} : vector<8x384xf32> to vector<8x128xf32>
    %57 = vector.extract_strided_slice %55 {offsets = [0, 0], sizes = [8, 128], strides = [1, 1]} : vector<8x384xf32> to vector<8x128xf32>
    %58 = arith.addf %56, %57 : vector<8x128xf32>
    %59 = arith.negf %58 : vector<8x128xf32>
    %60 = math.exp %59 : vector<8x128xf32>
    %cst_17 = arith.constant 1.000000e+00 : f32
    %61 = vector.broadcast %cst_17 : f32 to vector<8x128xf32>
    %62 = arith.addf %61, %60 : vector<8x128xf32>
    %63 = arith.divf %61, %62 : vector<8x128xf32>
    %64 = vector.extract_strided_slice %51 {offsets = [0, 128], sizes = [8, 128], strides = [1, 1]} : vector<8x384xf32> to vector<8x128xf32>
    %65 = vector.extract_strided_slice %55 {offsets = [0, 128], sizes = [8, 128], strides = [1, 1]} : vector<8x384xf32> to vector<8x128xf32>
    %66 = arith.addf %64, %65 : vector<8x128xf32>
    %67 = arith.negf %66 : vector<8x128xf32>
    %68 = math.exp %67 : vector<8x128xf32>
    %cst_18 = arith.constant 1.000000e+00 : f32
    %69 = vector.broadcast %cst_18 : f32 to vector<8x128xf32>
    %70 = arith.addf %69, %68 : vector<8x128xf32>
    %71 = arith.divf %69, %70 : vector<8x128xf32>
    %72 = vector.extract_strided_slice %51 {offsets = [0, 256], sizes = [8, 128], strides = [1, 1]} : vector<8x384xf32> to vector<8x128xf32>
    %73 = vector.extract_strided_slice %55 {offsets = [0, 256], sizes = [8, 128], strides = [1, 1]} : vector<8x384xf32> to vector<8x128xf32>
    %74 = arith.mulf %63, %73 : vector<8x128xf32>
    %75 = arith.addf %72, %74 : vector<8x128xf32>
    %76 = math.tanh %75 : vector<8x128xf32>
    %cst_19 = arith.constant 1.000000e+00 : f32
    %77 = vector.broadcast %cst_19 : f32 to vector<8x128xf32>
    %78 = arith.subf %77, %71 : vector<8x128xf32>
    %79 = arith.mulf %78, %76 : vector<8x128xf32>
    %80 = arith.mulf %71, %47 : vector<8x128xf32>
    %81 = arith.addf %79, %80 : vector<8x128xf32>
    %82 = arith.addi %6, %c1_i32 : i32
    %83 = vector.broadcast %82 : i32 to vector<8x1xi32>
    %84 = arith.cmpi slt, %83, %5 : vector<8x1xi32>
    %85 = vector.shape_cast %84 : vector<8x1xi1> to vector<8x1xi1>
    %86 = vector.broadcast %85 : vector<8x1xi1> to vector<8x128xi1>
    %87 = arith.select %86, %81, %47 : vector<8x128xi1>, vector<8x128xf32>
    %c2_i32 = arith.constant 2 : i32
    %88 = arith.index_cast %c2_i32 : i32 to index
    %c0_20 = arith.constant 0 : index
    %c0_21 = arith.constant 0 : index
    %89 = vector.load %arg3[%88, %c0_20, %c0_21] : memref<8x8x384xbf16, #tpu.memory_space<vmem>>, vector<1x8x384xbf16>
    %90 = vector.shape_cast %89 : vector<1x8x384xbf16> to vector<8x384xbf16>
    %91 = arith.extf %90 : vector<8x384xbf16> to vector<8x384xf32>
    %92 = arith.truncf %87 : vector<8x128xf32> to vector<8x128xbf16>
    %cst_22 = arith.constant dense<0.000000e+00> : vector<8x384xf32>
    %93 = tpu.matmul %92, %3, %cst_22 {dimension_numbers = #tpu.dot_dimension_numbers<[1], [0], [0], [1], [0, 0, 1, 1], [], []>} : vector<8x128xbf16>, vector<128x384xbf16>, vector<8x384xf32> -> vector<8x384xf32>
    %94 = vector.broadcast %4 : vector<1x384xf32> to vector<8x384xf32>
    %95 = arith.addf %93, %94 : vector<8x384xf32>
    %96 = vector.extract_strided_slice %91 {offsets = [0, 0], sizes = [8, 128], strides = [1, 1]} : vector<8x384xf32> to vector<8x128xf32>
    %97 = vector.extract_strided_slice %95 {offsets = [0, 0], sizes = [8, 128], strides = [1, 1]} : vector<8x384xf32> to vector<8x128xf32>
    %98 = arith.addf %96, %97 : vector<8x128xf32>
    %99 = arith.negf %98 : vector<8x128xf32>
    %100 = math.exp %99 : vector<8x128xf32>
    %cst_23 = arith.constant 1.000000e+00 : f32
    %101 = vector.broadcast %cst_23 : f32 to vector<8x128xf32>
    %102 = arith.addf %101, %100 : vector<8x128xf32>
    %103 = arith.divf %101, %102 : vector<8x128xf32>
    %104 = vector.extract_strided_slice %91 {offsets = [0, 128], sizes = [8, 128], strides = [1, 1]} : vector<8x384xf32> to vector<8x128xf32>
    %105 = vector.extract_strided_slice %95 {offsets = [0, 128], sizes = [8, 128], strides = [1, 1]} : vector<8x384xf32> to vector<8x128xf32>
    %106 = arith.addf %104, %105 : vector<8x128xf32>
    %107 = arith.negf %106 : vector<8x128xf32>
    %108 = math.exp %107 : vector<8x128xf32>
    %cst_24 = arith.constant 1.000000e+00 : f32
    %109 = vector.broadcast %cst_24 : f32 to vector<8x128xf32>
    %110 = arith.addf %109, %108 : vector<8x128xf32>
    %111 = arith.divf %109, %110 : vector<8x128xf32>
    %112 = vector.extract_strided_slice %91 {offsets = [0, 256], sizes = [8, 128], strides = [1, 1]} : vector<8x384xf32> to vector<8x128xf32>
    %113 = vector.extract_strided_slice %95 {offsets = [0, 256], sizes = [8, 128], strides = [1, 1]} : vector<8x384xf32> to vector<8x128xf32>
    %114 = arith.mulf %103, %113 : vector<8x128xf32>
    %115 = arith.addf %112, %114 : vector<8x128xf32>
    %116 = math.tanh %115 : vector<8x128xf32>
    %cst_25 = arith.constant 1.000000e+00 : f32
    %117 = vector.broadcast %cst_25 : f32 to vector<8x128xf32>
    %118 = arith.subf %117, %111 : vector<8x128xf32>
    %119 = arith.mulf %118, %116 : vector<8x128xf32>
    %120 = arith.mulf %111, %87 : vector<8x128xf32>
    %121 = arith.addf %119, %120 : vector<8x128xf32>
    %122 = arith.addi %6, %c2_i32 : i32
    %123 = vector.broadcast %122 : i32 to vector<8x1xi32>
    %124 = arith.cmpi slt, %123, %5 : vector<8x1xi32>
    %125 = vector.shape_cast %124 : vector<8x1xi1> to vector<8x1xi1>
    %126 = vector.broadcast %125 : vector<8x1xi1> to vector<8x128xi1>
    %127 = arith.select %126, %121, %87 : vector<8x128xi1>, vector<8x128xf32>
    %c3_i32 = arith.constant 3 : i32
    %128 = arith.index_cast %c3_i32 : i32 to index
    %c0_26 = arith.constant 0 : index
    %c0_27 = arith.constant 0 : index
    %129 = vector.load %arg3[%128, %c0_26, %c0_27] : memref<8x8x384xbf16, #tpu.memory_space<vmem>>, vector<1x8x384xbf16>
    %130 = vector.shape_cast %129 : vector<1x8x384xbf16> to vector<8x384xbf16>
    %131 = arith.extf %130 : vector<8x384xbf16> to vector<8x384xf32>
    %132 = arith.truncf %127 : vector<8x128xf32> to vector<8x128xbf16>
    %cst_28 = arith.constant dense<0.000000e+00> : vector<8x384xf32>
    %133 = tpu.matmul %132, %3, %cst_28 {dimension_numbers = #tpu.dot_dimension_numbers<[1], [0], [0], [1], [0, 0, 1, 1], [], []>} : vector<8x128xbf16>, vector<128x384xbf16>, vector<8x384xf32> -> vector<8x384xf32>
    %134 = vector.broadcast %4 : vector<1x384xf32> to vector<8x384xf32>
    %135 = arith.addf %133, %134 : vector<8x384xf32>
    %136 = vector.extract_strided_slice %131 {offsets = [0, 0], sizes = [8, 128], strides = [1, 1]} : vector<8x384xf32> to vector<8x128xf32>
    %137 = vector.extract_strided_slice %135 {offsets = [0, 0], sizes = [8, 128], strides = [1, 1]} : vector<8x384xf32> to vector<8x128xf32>
    %138 = arith.addf %136, %137 : vector<8x128xf32>
    %139 = arith.negf %138 : vector<8x128xf32>
    %140 = math.exp %139 : vector<8x128xf32>
    %cst_29 = arith.constant 1.000000e+00 : f32
    %141 = vector.broadcast %cst_29 : f32 to vector<8x128xf32>
    %142 = arith.addf %141, %140 : vector<8x128xf32>
    %143 = arith.divf %141, %142 : vector<8x128xf32>
    %144 = vector.extract_strided_slice %131 {offsets = [0, 128], sizes = [8, 128], strides = [1, 1]} : vector<8x384xf32> to vector<8x128xf32>
    %145 = vector.extract_strided_slice %135 {offsets = [0, 128], sizes = [8, 128], strides = [1, 1]} : vector<8x384xf32> to vector<8x128xf32>
    %146 = arith.addf %144, %145 : vector<8x128xf32>
    %147 = arith.negf %146 : vector<8x128xf32>
    %148 = math.exp %147 : vector<8x128xf32>
    %cst_30 = arith.constant 1.000000e+00 : f32
    %149 = vector.broadcast %cst_30 : f32 to vector<8x128xf32>
    %150 = arith.addf %149, %148 : vector<8x128xf32>
    %151 = arith.divf %149, %150 : vector<8x128xf32>
    %152 = vector.extract_strided_slice %131 {offsets = [0, 256], sizes = [8, 128], strides = [1, 1]} : vector<8x384xf32> to vector<8x128xf32>
    %153 = vector.extract_strided_slice %135 {offsets = [0, 256], sizes = [8, 128], strides = [1, 1]} : vector<8x384xf32> to vector<8x128xf32>
    %154 = arith.mulf %143, %153 : vector<8x128xf32>
    %155 = arith.addf %152, %154 : vector<8x128xf32>
    %156 = math.tanh %155 : vector<8x128xf32>
    %cst_31 = arith.constant 1.000000e+00 : f32
    %157 = vector.broadcast %cst_31 : f32 to vector<8x128xf32>
    %158 = arith.subf %157, %151 : vector<8x128xf32>
    %159 = arith.mulf %158, %156 : vector<8x128xf32>
    %160 = arith.mulf %151, %127 : vector<8x128xf32>
    %161 = arith.addf %159, %160 : vector<8x128xf32>
    %162 = arith.addi %6, %c3_i32 : i32
    %163 = vector.broadcast %162 : i32 to vector<8x1xi32>
    %164 = arith.cmpi slt, %163, %5 : vector<8x1xi32>
    %165 = vector.shape_cast %164 : vector<8x1xi1> to vector<8x1xi1>
    %166 = vector.broadcast %165 : vector<8x1xi1> to vector<8x128xi1>
    %167 = arith.select %166, %161, %127 : vector<8x128xi1>, vector<8x128xf32>
    %c4_i32 = arith.constant 4 : i32
    %168 = arith.index_cast %c4_i32 : i32 to index
    %c0_32 = arith.constant 0 : index
    %c0_33 = arith.constant 0 : index
    %169 = vector.load %arg3[%168, %c0_32, %c0_33] : memref<8x8x384xbf16, #tpu.memory_space<vmem>>, vector<1x8x384xbf16>
    %170 = vector.shape_cast %169 : vector<1x8x384xbf16> to vector<8x384xbf16>
    %171 = arith.extf %170 : vector<8x384xbf16> to vector<8x384xf32>
    %172 = arith.truncf %167 : vector<8x128xf32> to vector<8x128xbf16>
    %cst_34 = arith.constant dense<0.000000e+00> : vector<8x384xf32>
    %173 = tpu.matmul %172, %3, %cst_34 {dimension_numbers = #tpu.dot_dimension_numbers<[1], [0], [0], [1], [0, 0, 1, 1], [], []>} : vector<8x128xbf16>, vector<128x384xbf16>, vector<8x384xf32> -> vector<8x384xf32>
    %174 = vector.broadcast %4 : vector<1x384xf32> to vector<8x384xf32>
    %175 = arith.addf %173, %174 : vector<8x384xf32>
    %176 = vector.extract_strided_slice %171 {offsets = [0, 0], sizes = [8, 128], strides = [1, 1]} : vector<8x384xf32> to vector<8x128xf32>
    %177 = vector.extract_strided_slice %175 {offsets = [0, 0], sizes = [8, 128], strides = [1, 1]} : vector<8x384xf32> to vector<8x128xf32>
    %178 = arith.addf %176, %177 : vector<8x128xf32>
    %179 = arith.negf %178 : vector<8x128xf32>
    %180 = math.exp %179 : vector<8x128xf32>
    %cst_35 = arith.constant 1.000000e+00 : f32
    %181 = vector.broadcast %cst_35 : f32 to vector<8x128xf32>
    %182 = arith.addf %181, %180 : vector<8x128xf32>
    %183 = arith.divf %181, %182 : vector<8x128xf32>
    %184 = vector.extract_strided_slice %171 {offsets = [0, 128], sizes = [8, 128], strides = [1, 1]} : vector<8x384xf32> to vector<8x128xf32>
    %185 = vector.extract_strided_slice %175 {offsets = [0, 128], sizes = [8, 128], strides = [1, 1]} : vector<8x384xf32> to vector<8x128xf32>
    %186 = arith.addf %184, %185 : vector<8x128xf32>
    %187 = arith.negf %186 : vector<8x128xf32>
    %188 = math.exp %187 : vector<8x128xf32>
    %cst_36 = arith.constant 1.000000e+00 : f32
    %189 = vector.broadcast %cst_36 : f32 to vector<8x128xf32>
    %190 = arith.addf %189, %188 : vector<8x128xf32>
    %191 = arith.divf %189, %190 : vector<8x128xf32>
    %192 = vector.extract_strided_slice %171 {offsets = [0, 256], sizes = [8, 128], strides = [1, 1]} : vector<8x384xf32> to vector<8x128xf32>
    %193 = vector.extract_strided_slice %175 {offsets = [0, 256], sizes = [8, 128], strides = [1, 1]} : vector<8x384xf32> to vector<8x128xf32>
    %194 = arith.mulf %183, %193 : vector<8x128xf32>
    %195 = arith.addf %192, %194 : vector<8x128xf32>
    %196 = math.tanh %195 : vector<8x128xf32>
    %cst_37 = arith.constant 1.000000e+00 : f32
    %197 = vector.broadcast %cst_37 : f32 to vector<8x128xf32>
    %198 = arith.subf %197, %191 : vector<8x128xf32>
    %199 = arith.mulf %198, %196 : vector<8x128xf32>
    %200 = arith.mulf %191, %167 : vector<8x128xf32>
    %201 = arith.addf %199, %200 : vector<8x128xf32>
    %202 = arith.addi %6, %c4_i32 : i32
    %203 = vector.broadcast %202 : i32 to vector<8x1xi32>
    %204 = arith.cmpi slt, %203, %5 : vector<8x1xi32>
    %205 = vector.shape_cast %204 : vector<8x1xi1> to vector<8x1xi1>
    %206 = vector.broadcast %205 : vector<8x1xi1> to vector<8x128xi1>
    %207 = arith.select %206, %201, %167 : vector<8x128xi1>, vector<8x128xf32>
    %c5_i32 = arith.constant 5 : i32
    %208 = arith.index_cast %c5_i32 : i32 to index
    %c0_38 = arith.constant 0 : index
    %c0_39 = arith.constant 0 : index
    %209 = vector.load %arg3[%208, %c0_38, %c0_39] : memref<8x8x384xbf16, #tpu.memory_space<vmem>>, vector<1x8x384xbf16>
    %210 = vector.shape_cast %209 : vector<1x8x384xbf16> to vector<8x384xbf16>
    %211 = arith.extf %210 : vector<8x384xbf16> to vector<8x384xf32>
    %212 = arith.truncf %207 : vector<8x128xf32> to vector<8x128xbf16>
    %cst_40 = arith.constant dense<0.000000e+00> : vector<8x384xf32>
    %213 = tpu.matmul %212, %3, %cst_40 {dimension_numbers = #tpu.dot_dimension_numbers<[1], [0], [0], [1], [0, 0, 1, 1], [], []>} : vector<8x128xbf16>, vector<128x384xbf16>, vector<8x384xf32> -> vector<8x384xf32>
    %214 = vector.broadcast %4 : vector<1x384xf32> to vector<8x384xf32>
    %215 = arith.addf %213, %214 : vector<8x384xf32>
    %216 = vector.extract_strided_slice %211 {offsets = [0, 0], sizes = [8, 128], strides = [1, 1]} : vector<8x384xf32> to vector<8x128xf32>
    %217 = vector.extract_strided_slice %215 {offsets = [0, 0], sizes = [8, 128], strides = [1, 1]} : vector<8x384xf32> to vector<8x128xf32>
    %218 = arith.addf %216, %217 : vector<8x128xf32>
    %219 = arith.negf %218 : vector<8x128xf32>
    %220 = math.exp %219 : vector<8x128xf32>
    %cst_41 = arith.constant 1.000000e+00 : f32
    %221 = vector.broadcast %cst_41 : f32 to vector<8x128xf32>
    %222 = arith.addf %221, %220 : vector<8x128xf32>
    %223 = arith.divf %221, %222 : vector<8x128xf32>
    %224 = vector.extract_strided_slice %211 {offsets = [0, 128], sizes = [8, 128], strides = [1, 1]} : vector<8x384xf32> to vector<8x128xf32>
    %225 = vector.extract_strided_slice %215 {offsets = [0, 128], sizes = [8, 128], strides = [1, 1]} : vector<8x384xf32> to vector<8x128xf32>
    %226 = arith.addf %224, %225 : vector<8x128xf32>
    %227 = arith.negf %226 : vector<8x128xf32>
    %228 = math.exp %227 : vector<8x128xf32>
    %cst_42 = arith.constant 1.000000e+00 : f32
    %229 = vector.broadcast %cst_42 : f32 to vector<8x128xf32>
    %230 = arith.addf %229, %228 : vector<8x128xf32>
    %231 = arith.divf %229, %230 : vector<8x128xf32>
    %232 = vector.extract_strided_slice %211 {offsets = [0, 256], sizes = [8, 128], strides = [1, 1]} : vector<8x384xf32> to vector<8x128xf32>
    %233 = vector.extract_strided_slice %215 {offsets = [0, 256], sizes = [8, 128], strides = [1, 1]} : vector<8x384xf32> to vector<8x128xf32>
    %234 = arith.mulf %223, %233 : vector<8x128xf32>
    %235 = arith.addf %232, %234 : vector<8x128xf32>
    %236 = math.tanh %235 : vector<8x128xf32>
    %cst_43 = arith.constant 1.000000e+00 : f32
    %237 = vector.broadcast %cst_43 : f32 to vector<8x128xf32>
    %238 = arith.subf %237, %231 : vector<8x128xf32>
    %239 = arith.mulf %238, %236 : vector<8x128xf32>
    %240 = arith.mulf %231, %207 : vector<8x128xf32>
    %241 = arith.addf %239, %240 : vector<8x128xf32>
    %242 = arith.addi %6, %c5_i32 : i32
    %243 = vector.broadcast %242 : i32 to vector<8x1xi32>
    %244 = arith.cmpi slt, %243, %5 : vector<8x1xi32>
    %245 = vector.shape_cast %244 : vector<8x1xi1> to vector<8x1xi1>
    %246 = vector.broadcast %245 : vector<8x1xi1> to vector<8x128xi1>
    %247 = arith.select %246, %241, %207 : vector<8x128xi1>, vector<8x128xf32>
    %c6_i32 = arith.constant 6 : i32
    %248 = arith.index_cast %c6_i32 : i32 to index
    %c0_44 = arith.constant 0 : index
    %c0_45 = arith.constant 0 : index
    %249 = vector.load %arg3[%248, %c0_44, %c0_45] : memref<8x8x384xbf16, #tpu.memory_space<vmem>>, vector<1x8x384xbf16>
    %250 = vector.shape_cast %249 : vector<1x8x384xbf16> to vector<8x384xbf16>
    %251 = arith.extf %250 : vector<8x384xbf16> to vector<8x384xf32>
    %252 = arith.truncf %247 : vector<8x128xf32> to vector<8x128xbf16>
    %cst_46 = arith.constant dense<0.000000e+00> : vector<8x384xf32>
    %253 = tpu.matmul %252, %3, %cst_46 {dimension_numbers = #tpu.dot_dimension_numbers<[1], [0], [0], [1], [0, 0, 1, 1], [], []>} : vector<8x128xbf16>, vector<128x384xbf16>, vector<8x384xf32> -> vector<8x384xf32>
    %254 = vector.broadcast %4 : vector<1x384xf32> to vector<8x384xf32>
    %255 = arith.addf %253, %254 : vector<8x384xf32>
    %256 = vector.extract_strided_slice %251 {offsets = [0, 0], sizes = [8, 128], strides = [1, 1]} : vector<8x384xf32> to vector<8x128xf32>
    %257 = vector.extract_strided_slice %255 {offsets = [0, 0], sizes = [8, 128], strides = [1, 1]} : vector<8x384xf32> to vector<8x128xf32>
    %258 = arith.addf %256, %257 : vector<8x128xf32>
    %259 = arith.negf %258 : vector<8x128xf32>
    %260 = math.exp %259 : vector<8x128xf32>
    %cst_47 = arith.constant 1.000000e+00 : f32
    %261 = vector.broadcast %cst_47 : f32 to vector<8x128xf32>
    %262 = arith.addf %261, %260 : vector<8x128xf32>
    %263 = arith.divf %261, %262 : vector<8x128xf32>
    %264 = vector.extract_strided_slice %251 {offsets = [0, 128], sizes = [8, 128], strides = [1, 1]} : vector<8x384xf32> to vector<8x128xf32>
    %265 = vector.extract_strided_slice %255 {offsets = [0, 128], sizes = [8, 128], strides = [1, 1]} : vector<8x384xf32> to vector<8x128xf32>
    %266 = arith.addf %264, %265 : vector<8x128xf32>
    %267 = arith.negf %266 : vector<8x128xf32>
    %268 = math.exp %267 : vector<8x128xf32>
    %cst_48 = arith.constant 1.000000e+00 : f32
    %269 = vector.broadcast %cst_48 : f32 to vector<8x128xf32>
    %270 = arith.addf %269, %268 : vector<8x128xf32>
    %271 = arith.divf %269, %270 : vector<8x128xf32>
    %272 = vector.extract_strided_slice %251 {offsets = [0, 256], sizes = [8, 128], strides = [1, 1]} : vector<8x384xf32> to vector<8x128xf32>
    %273 = vector.extract_strided_slice %255 {offsets = [0, 256], sizes = [8, 128], strides = [1, 1]} : vector<8x384xf32> to vector<8x128xf32>
    %274 = arith.mulf %263, %273 : vector<8x128xf32>
    %275 = arith.addf %272, %274 : vector<8x128xf32>
    %276 = math.tanh %275 : vector<8x128xf32>
    %cst_49 = arith.constant 1.000000e+00 : f32
    %277 = vector.broadcast %cst_49 : f32 to vector<8x128xf32>
    %278 = arith.subf %277, %271 : vector<8x128xf32>
    %279 = arith.mulf %278, %276 : vector<8x128xf32>
    %280 = arith.mulf %271, %247 : vector<8x128xf32>
    %281 = arith.addf %279, %280 : vector<8x128xf32>
    %282 = arith.addi %6, %c6_i32 : i32
    %283 = vector.broadcast %282 : i32 to vector<8x1xi32>
    %284 = arith.cmpi slt, %283, %5 : vector<8x1xi32>
    %285 = vector.shape_cast %284 : vector<8x1xi1> to vector<8x1xi1>
    %286 = vector.broadcast %285 : vector<8x1xi1> to vector<8x128xi1>
    %287 = arith.select %286, %281, %247 : vector<8x128xi1>, vector<8x128xf32>
    %c7_i32 = arith.constant 7 : i32
    %288 = arith.index_cast %c7_i32 : i32 to index
    %c0_50 = arith.constant 0 : index
    %c0_51 = arith.constant 0 : index
    %289 = vector.load %arg3[%288, %c0_50, %c0_51] : memref<8x8x384xbf16, #tpu.memory_space<vmem>>, vector<1x8x384xbf16>
    %290 = vector.shape_cast %289 : vector<1x8x384xbf16> to vector<8x384xbf16>
    %291 = arith.extf %290 : vector<8x384xbf16> to vector<8x384xf32>
    %292 = arith.truncf %287 : vector<8x128xf32> to vector<8x128xbf16>
    %cst_52 = arith.constant dense<0.000000e+00> : vector<8x384xf32>
    %293 = tpu.matmul %292, %3, %cst_52 {dimension_numbers = #tpu.dot_dimension_numbers<[1], [0], [0], [1], [0, 0, 1, 1], [], []>} : vector<8x128xbf16>, vector<128x384xbf16>, vector<8x384xf32> -> vector<8x384xf32>
    %294 = vector.broadcast %4 : vector<1x384xf32> to vector<8x384xf32>
    %295 = arith.addf %293, %294 : vector<8x384xf32>
    %296 = vector.extract_strided_slice %291 {offsets = [0, 0], sizes = [8, 128], strides = [1, 1]} : vector<8x384xf32> to vector<8x128xf32>
    %297 = vector.extract_strided_slice %295 {offsets = [0, 0], sizes = [8, 128], strides = [1, 1]} : vector<8x384xf32> to vector<8x128xf32>
    %298 = arith.addf %296, %297 : vector<8x128xf32>
    %299 = arith.negf %298 : vector<8x128xf32>
    %300 = math.exp %299 : vector<8x128xf32>
    %cst_53 = arith.constant 1.000000e+00 : f32
    %301 = vector.broadcast %cst_53 : f32 to vector<8x128xf32>
    %302 = arith.addf %301, %300 : vector<8x128xf32>
    %303 = arith.divf %301, %302 : vector<8x128xf32>
    %304 = vector.extract_strided_slice %291 {offsets = [0, 128], sizes = [8, 128], strides = [1, 1]} : vector<8x384xf32> to vector<8x128xf32>
    %305 = vector.extract_strided_slice %295 {offsets = [0, 128], sizes = [8, 128], strides = [1, 1]} : vector<8x384xf32> to vector<8x128xf32>
    %306 = arith.addf %304, %305 : vector<8x128xf32>
    %307 = arith.negf %306 : vector<8x128xf32>
    %308 = math.exp %307 : vector<8x128xf32>
    %cst_54 = arith.constant 1.000000e+00 : f32
    %309 = vector.broadcast %cst_54 : f32 to vector<8x128xf32>
    %310 = arith.addf %309, %308 : vector<8x128xf32>
    %311 = arith.divf %309, %310 : vector<8x128xf32>
    %312 = vector.extract_strided_slice %291 {offsets = [0, 256], sizes = [8, 128], strides = [1, 1]} : vector<8x384xf32> to vector<8x128xf32>
    %313 = vector.extract_strided_slice %295 {offsets = [0, 256], sizes = [8, 128], strides = [1, 1]} : vector<8x384xf32> to vector<8x128xf32>
    %314 = arith.mulf %303, %313 : vector<8x128xf32>
    %315 = arith.addf %312, %314 : vector<8x128xf32>
    %316 = math.tanh %315 : vector<8x128xf32>
    %cst_55 = arith.constant 1.000000e+00 : f32
    %317 = vector.broadcast %cst_55 : f32 to vector<8x128xf32>
    %318 = arith.subf %317, %311 : vector<8x128xf32>
    %319 = arith.mulf %318, %316 : vector<8x128xf32>
    %320 = arith.mulf %311, %287 : vector<8x128xf32>
    %321 = arith.addf %319, %320 : vector<8x128xf32>
    %322 = arith.addi %6, %c7_i32 : i32
    %323 = vector.broadcast %322 : i32 to vector<8x1xi32>
    %324 = arith.cmpi slt, %323, %5 : vector<8x1xi32>
    %325 = vector.shape_cast %324 : vector<8x1xi1> to vector<8x1xi1>
    %326 = vector.broadcast %325 : vector<8x1xi1> to vector<8x128xi1>
    %327 = arith.select %326, %321, %287 : vector<8x128xi1>, vector<8x128xf32>
    %c8_i32_56 = arith.constant 8 : i32
    %c0_57 = arith.constant 0 : index
    %c0_58 = arith.constant 0 : index
    %328 = vector.load %arg9[%c0_57, %c0_58] : memref<8x128xf32, #tpu.memory_space<vmem>>, vector<8x128xf32>
    tpu.vector_store %arg9[%c0_57, %c0_58], %327 {strides = array<i32>} : memref<8x128xf32, #tpu.memory_space<vmem>>, vector<8x128xf32>,
    %c0_i32_59 = arith.constant 0 : i32
    %329 = arith.cmpi eq, %arg1, %c0_i32_59 : i32
    %330 = arith.extui %329 : i1 to i32
    %c0_i32_60 = arith.constant 0 : i32
    %331 = arith.cmpi ne, %330, %c0_i32_60 : i32
    scf.if %331 {
      %c0_61 = arith.constant 0 : index
      %c0_62 = arith.constant 0 : index
      %332 = vector.load %arg9[%c0_61, %c0_62] : memref<8x128xf32, #tpu.memory_space<vmem>>, vector<8x128xf32>
      %c0_63 = arith.constant 0 : index
      %c0_64 = arith.constant 0 : index
      %333 = vector.load %arg6[%c0_63, %c0_64] : memref<1x128xf32, #tpu.memory_space<vmem>>, vector<1x128xf32>
      %334 = vector.broadcast %333 : vector<1x128xf32> to vector<8x128xf32>
      %335 = arith.mulf %332, %334 : vector<8x128xf32>
      %cst_65 = arith.constant dense<0.000000e+00> : vector<8xf32>
      %336 = vector.multi_reduction <add>, %335, %cst_65 [1] : vector<8x128xf32> to vector<8xf32>
      %337 = vector.shape_cast %336 : vector<8xf32> to vector<8x1xf32>
      %c0_66 = arith.constant 0 : index
      %c0_67 = arith.constant 0 : index
      %338 = vector.load %arg7[%c0_66, %c0_67] : memref<1x1xf32, #tpu.memory_space<vmem>>, vector<1x1xf32>
      %339 = vector.broadcast %338 : vector<1x1xf32> to vector<8x1xf32>
      %340 = arith.addf %337, %339 : vector<8x1xf32>
      %341 = arith.negf %340 : vector<8x1xf32>
      %342 = math.exp %341 : vector<8x1xf32>
      %cst_68 = arith.constant 1.000000e+00 : f32
      %343 = vector.broadcast %cst_68 : f32 to vector<8x1xf32>
      %344 = arith.addf %343, %342 : vector<8x1xf32>
      %345 = arith.divf %343, %344 : vector<8x1xf32>
      %c0_69 = arith.constant 0 : index
      %c0_70 = arith.constant 0 : index
      %346 = vector.load %arg8[%c0_69, %c0_70] : memref<8x1xf32, #tpu.memory_space<vmem>>, vector<8x1xf32>
      tpu.vector_store %arg8[%c0_69, %c0_70], %345 {strides = array<i32>} : memref<8x1xf32, #tpu.memory_space<vmem>>, vector<8x1xf32>,
    } else {
    }
    return
  }
  func.func @transform_0(%arg0: i32, %arg1: i32) -> (i32, i32) {
    %c0_i32 = arith.constant 0 : i32
    %c0_i32_0 = arith.constant 0 : i32
    return %arg0, %c0_i32 : i32, i32
  }
  func.func @transform_1(%arg0: i32, %arg1: i32) -> (i32, i32, i32) {
    %c0_i32 = arith.constant 0 : i32
    %c0_i32_0 = arith.constant 0 : i32
    return %arg1, %arg0, %c0_i32 : i32, i32, i32
  }
  func.func @transform_2(%arg0: i32, %arg1: i32) -> (i32, i32) {
    %c0_i32 = arith.constant 0 : i32
    %c0_i32_0 = arith.constant 0 : i32
    %c0_i32_1 = arith.constant 0 : i32
    return %c0_i32, %c0_i32_0 : i32, i32
  }
  func.func @transform_3(%arg0: i32, %arg1: i32) -> (i32, i32) {
    %c0_i32 = arith.constant 0 : i32
    %c0_i32_0 = arith.constant 0 : i32
    %c0_i32_1 = arith.constant 0 : i32
    return %c0_i32, %c0_i32_0 : i32, i32
  }
  func.func @transform_4(%arg0: i32, %arg1: i32) -> (i32, i32) {
    %c0_i32 = arith.constant 0 : i32
    %c0_i32_0 = arith.constant 0 : i32
    %c0_i32_1 = arith.constant 0 : i32
    return %c0_i32, %c0_i32_0 : i32, i32
  }
  func.func @transform_5(%arg0: i32, %arg1: i32) -> (i32, i32) {
    %c0_i32 = arith.constant 0 : i32
    %c0_i32_0 = arith.constant 0 : i32
    %c0_i32_1 = arith.constant 0 : i32
    return %c0_i32, %c0_i32_0 : i32, i32
  }
  func.func @transform_6(%arg0: i32, %arg1: i32) -> (i32, i32) {
    %c0_i32 = arith.constant 0 : i32
    %c0_i32_0 = arith.constant 0 : i32
    return %arg0, %c0_i32 : i32, i32
  }
}

</mosaic_0001>

<llo_original>
// kernel: rnn_forward.1
$region0: #{rnn_forward.1}
  #allocation0 [shape = 'u32[]', space=smem, size = 0x4, offset = 0x4, fixed_abs, tag = 'smem constant byte address 0x4 - core index']
  #allocation1 [shape = 'u32[72,128]{1,0:T(1,128)}', space=vmem, size = 0x9000, scoped, tag = 'internal scratch']
  #allocation2 [shape = 'f32[8,128]{1,0:T(8,128)}', space=vmem, size = 0x1000, scoped, tag = 'scratch operand']
  #allocation3 [shape = 'f32[1,1]{1,0:T(1,128)S(1)}', space=vmem, size = 0x200, scoped, tag = 'scoped memory for rnn_forward.1']
  %s0 = inlined_call_operand.vmem [shape: s32[8,1], index: 0, kind: input, shape index: {}]
  %s1 = inlined_call_operand.vmem [shape: bf16[8,8,384], index: 1, kind: input, shape index: {}]
  %s2 = inlined_call_operand.vmem [shape: bf16[128,384], index: 2, kind: input, shape index: {}]
  %s3 = inlined_call_operand.vmem [shape: f32[1,384], index: 3, kind: input, shape index: {}]
  %s4 = inlined_call_operand.vmem [shape: f32[1,128], index: 4, kind: input, shape index: {}]
  %s5 = inlined_call_operand.<no memory space> [shape: f32[1,1], index: 5, kind: input, shape index: {}]
  %s6 = inlined_call_operand.vmem [shape: f32[8,1], index: 6, kind: output, shape index: {}]
  %s7 = sld [smem:[#allocation0]]
  $region42: #{rnn_forward.1} parent=0
    _
  %s9 = ssub.s32 1, %s7
  %s10 = scalar_select 0, %s9, %s7
  %v11 = vstv %s5
  %12 = vst [vmem:[#allocation3] sm:$0x1] %v11
  // Predicated region
  $region2: #{rnn_forward.1} parent=0 // pred_check
    _
  $region3: #{rnn_forward.1} parent=0 // pred_check_branch
    %14 = sbr.rel (0) target = $region5
  $region4: #{rnn_forward.1} parent=0 // pred_region
    _
  $region5: #{rnn_forward.1} parent=0 // pred_fallthru
    _
  // Predicated region
  $region6: #{rnn_forward.1} parent=0 // pred_check
    _
  $region7: #{rnn_forward.1} parent=0 // pred_check_branch
    %16 = sbr.rel (0) target = $region9
  $region8: #{rnn_forward.1} parent=0 // pred_region
    _
  $region9: #{rnn_forward.1} parent=0 // pred_fallthru
    _
  // Predicated region
  $region10: #{rnn_forward.1} parent=0 // pred_check
    _
  $region11: #{rnn_forward.1} parent=0 // pred_check_branch
    %18 = sbr.rel (0) target = $region13
  $region12: #{rnn_forward.1} parent=0 // pred_region
    _
  $region13: #{rnn_forward.1} parent=0 // pred_fallthru
    _
  // Predicated region
  $region14: #{rnn_forward.1} parent=0 // pred_check
    _
  $region15: #{rnn_forward.1} parent=0 // pred_check_branch
    %20 = sbr.rel (0) target = $region17
  $region16: #{rnn_forward.1} parent=0 // pred_region
    _
  $region17: #{rnn_forward.1} parent=0 // pred_fallthru
    _
  // Predicated region
  $region18: #{rnn_forward.1} parent=0 // pred_check
    _
  $region19: #{rnn_forward.1} parent=0 // pred_check_branch
    %22 = sbr.rel (0) target = $region21
  $region20: #{rnn_forward.1} parent=0 // pred_region
    _
  $region21: #{rnn_forward.1} parent=0 // pred_fallthru
    _
  // Predicated region
  $region22: #{rnn_forward.1} parent=0 // pred_check
    _
  $region23: #{rnn_forward.1} parent=0 // pred_check_branch
    %24 = sbr.rel (0) target = $region25
  $region24: #{rnn_forward.1} parent=0 // pred_region
    _
  $region25: #{rnn_forward.1} parent=0 // pred_fallthru
    _
  %p25 = scmp.eq.s32.totalorder 0, 0
  // Predicated region
  $region26: #{rnn_forward.1} parent=0 // pred_check
    %p26 = pneg %p25
  $region27: #{rnn_forward.1} parent=0 // pred_check_branch
    %28 = sbr.rel (%p26) target = $region29
  $region28: #{rnn_forward.1} parent=0 // pred_region
    %29 = vst [vmem:[#allocation2] sm:$0xff] 0.0
  $region29: #{rnn_forward.1} parent=0 // pred_fallthru
    _
  %v30 = vld [vmem:[%s2] sm:$0xff]
  %v31 = vld [vmem:[%s2 + $0x8] sm:$0xf]
  %v32 = vld [vmem:[%s2 + $0xc] sm:$0xff]
  %v33 = vld [vmem:[%s2 + $0x14] sm:$0xf]
  %v34 = vld [vmem:[%s2 + $0x18] sm:$0xff]
  %v35 = vld [vmem:[%s2 + $0x20] sm:$0xf]
  %v36 = vld [vmem:[%s2 + $0x24] sm:$0xff]
  %v37 = vld [vmem:[%s2 + $0x2c] sm:$0xf]
  %v38 = vld [vmem:[%s2 + $0x30] sm:$0xff]
  %v39 = vld [vmem:[%s2 + $0x38] sm:$0xf]
  %v40 = vld [vmem:[%s2 + $0x3c] sm:$0xff]
  %v41 = vld [vmem:[%s2 + $0x44] sm:$0xf]
  %v42 = vld [vmem:[%s2 + $0x48] sm:$0xff]
  %v43 = vld [vmem:[%s2 + $0x50] sm:$0xf]
  %v44 = vld [vmem:[%s2 + $0x54] sm:$0xff]
  %v45 = vld [vmem:[%s2 + $0x5c] sm:$0xf]
  %v46 = vld [vmem:[%s2 + $0x60] sm:$0xff]
  %v47 = vld [vmem:[%s2 + $0x68] sm:$0xf]
  %v48 = vld [vmem:[%s2 + $0x6c] sm:$0xff]
  %v49 = vld [vmem:[%s2 + $0x74] sm:$0xf]
  %v50 = vld [vmem:[%s2 + $0x78] sm:$0xff]
  %v51 = vld [vmem:[%s2 + $0x80] sm:$0xf]
  %v52 = vld [vmem:[%s2 + $0x84] sm:$0xff]
  %v53 = vld [vmem:[%s2 + $0x8c] sm:$0xf]
  %v54 = vld [vmem:[%s2 + $0x90] sm:$0xff]
  %v55 = vld [vmem:[%s2 + $0x98] sm:$0xf]
  %v56 = vld [vmem:[%s2 + $0x9c] sm:$0xff]
  %v57 = vld [vmem:[%s2 + $0xa4] sm:$0xf]
  %v58 = vld [vmem:[%s2 + $0xa8] sm:$0xff]
  %v59 = vld [vmem:[%s2 + $0xb0] sm:$0xf]
  %v60 = vld [vmem:[%s2 + $0xb4] sm:$0xff]
  %v61 = vld [vmem:[%s2 + $0xbc] sm:$0xf]
  %v62 = vld [vmem:[%s3] sm:$0x7]
  %v63 = vld [vmem:[%s0] sm:$0xff]
  %s64 = smul.u32 0, 8
  %v65 = vld [vmem:[#allocation2] sm:$0xff]
  %v66 = vld [vmem:[%s1] sm:$0xff]
  %v67 = vld [vmem:[%s1 + $0x8] sm:$0xf]
  %v68 = vunpack.c.l.bf16 %v66
  %v69 = vunpack.c.h.bf16 %v66
  %v70 = vunpack.c.l.bf16 %v67
  %v71 = vpack.c.bf16 %v65, %v65
  %v73 = vperm.slane %v62, 0
  %v74 = vperm.slane %v62, 1
  %v75 = vperm.slane %v62, 2
  %v111 = vunpack.c.l.b16 %v30
  %v112 = vunpack.c.h.b16 %v30
  %v113 = vunpack.c.l.b16 %v31
  %v114 = vunpack.c.l.b16 %v32
  %v115 = vunpack.c.h.b16 %v32
  %v116 = vunpack.c.l.b16 %v33
  %v117 = vunpack.c.l.b16 %v34
  %v118 = vunpack.c.h.b16 %v34
  %v119 = vunpack.c.l.b16 %v35
  %v120 = vunpack.c.l.b16 %v36
  %v121 = vunpack.c.h.b16 %v36
  %v122 = vunpack.c.l.b16 %v37
  %v123 = vunpack.c.l.b16 %v38
  %v124 = vunpack.c.h.b16 %v38
  %v125 = vunpack.c.l.b16 %v39
  %v126 = vunpack.c.l.b16 %v40
  %v127 = vunpack.c.h.b16 %v40
  %v128 = vunpack.c.l.b16 %v41
  %v129 = vunpack.c.l.b16 %v42
  %v130 = vunpack.c.h.b16 %v42
  %v131 = vunpack.c.l.b16 %v43
  %v132 = vunpack.c.l.b16 %v44
  %v133 = vunpack.c.h.b16 %v44
  %v134 = vunpack.c.l.b16 %v45
  %v135 = vunpack.c.l.b16 %v46
  %v136 = vunpack.c.h.b16 %v46
  %v137 = vunpack.c.l.b16 %v47
  %v138 = vunpack.c.l.b16 %v48
  %v139 = vunpack.c.h.b16 %v48
  %v140 = vunpack.c.l.b16 %v49
  %v141 = vunpack.c.l.b16 %v50
  %v142 = vunpack.c.h.b16 %v50
  %v143 = vunpack.c.l.b16 %v51
  %v144 = vunpack.c.l.b16 %v52
  %v145 = vunpack.c.h.b16 %v52
  %v146 = vunpack.c.l.b16 %v53
  %v147 = vunpack.c.l.b16 %v54
  %v148 = vunpack.c.h.b16 %v54
  %v149 = vunpack.c.l.b16 %v55
  %v150 = vunpack.c.l.b16 %v56
  %v151 = vunpack.c.h.b16 %v56
  %v152 = vunpack.c.l.b16 %v57
  %v153 = vunpack.c.l.b16 %v58
  %v154 = vunpack.c.h.b16 %v58
  %v155 = vunpack.c.l.b16 %v59
  %v156 = vunpack.c.l.b16 %v60
  %v157 = vunpack.c.h.b16 %v60
  %v158 = vunpack.c.l.b16 %v61
  %v159 = vpack.c.b16 %v114, %v111
  %v160 = vpack.c.b16 %v115, %v112
  %v161 = vpack.c.b16 %v116, %v113
  %v162 = vpack.c.b16 %v120, %v117
  %v163 = vpack.c.b16 %v121, %v118
  %v164 = vpack.c.b16 %v122, %v119
  %v165 = vpack.c.b16 %v126, %v123
  %v166 = vpack.c.b16 %v127, %v124
  %v167 = vpack.c.b16 %v128, %v125
  %v168 = vpack.c.b16 %v132, %v129
  %v169 = vpack.c.b16 %v133, %v130
  %v170 = vpack.c.b16 %v134, %v131
  %v171 = vpack.c.b16 %v138, %v135
  %v172 = vpack.c.b16 %v139, %v136
  %v173 = vpack.c.b16 %v140, %v137
  %v174 = vpack.c.b16 %v144, %v141
  %v175 = vpack.c.b16 %v145, %v142
  %v176 = vpack.c.b16 %v146, %v143
  %v177 = vpack.c.b16 %v150, %v147
  %v178 = vpack.c.b16 %v151, %v148
  %v179 = vpack.c.b16 %v152, %v149
  %v180 = vpack.c.b16 %v156, %v153
  %v181 = vpack.c.b16 %v157, %v154
  %v182 = vpack.c.b16 %v158, %v155
  %207 = vmatpush.bf16.msra.mxu0 %v180
  %208 = vmatpush.bf16.msra.mxu0 %v177
  %209 = vmatpush.bf16.msra.mxu0 %v174
  %210 = vmatpush.bf16.msra.mxu0 %v171
  %211 = vmatpush.bf16.msra.mxu0 %v168
  %212 = vmatpush.bf16.msra.mxu0 %v165
  %213 = vmatpush.bf16.msra.mxu0 %v162
  %214 = vmatpush.bf16.msra.mxu0 %v159
  %215 = vmatmul.bf16.gmra.mxu0 %v71
  %v216 = vpop.f32.mrf.mxu0
  %v217 = vadd.f32 %v73, %v216
  %v218 = vpop.f32.mrf.mxu0
  %219 = vdwg.mxu0
  %220 = vmatpush.bf16.msra.mxu0 %v181
  %221 = vmatpush.bf16.msra.mxu0 %v178
  %222 = vmatpush.bf16.msra.mxu0 %v175
  %223 = vmatpush.bf16.msra.mxu0 %v172
  %224 = vmatpush.bf16.msra.mxu0 %v169
  %225 = vmatpush.bf16.msra.mxu0 %v166
  %226 = vmatpush.bf16.msra.mxu0 %v163
  %227 = vmatpush.bf16.msra.mxu0 %v160
  %228 = vmatmul.bf16.gmra.mxu0 %v71
  %v229 = vpop.f32.mrf.mxu0
  %v230 = vadd.f32 %v74, %v229
  %v231 = vpop.f32.mrf.mxu0
  %232 = vdwg.mxu0
  %233 = vmatpush.bf16.msra.mxu0 %v182
  %234 = vmatpush.bf16.msra.mxu0 %v179
  %235 = vmatpush.bf16.msra.mxu0 %v176
  %236 = vmatpush.bf16.msra.mxu0 %v173
  %237 = vmatpush.bf16.msra.mxu0 %v170
  %238 = vmatpush.bf16.msra.mxu0 %v167
  %239 = vmatpush.bf16.msra.mxu0 %v164
  %240 = vmatpush.bf16.msra.mxu0 %v161
  %241 = vmatmul.bf16.gmra.mxu0 %v71
  %v242 = vpop.f32.mrf.mxu0
  %v243 = vadd.f32 %v75, %v242
  %v244 = vpop.f32.mrf.mxu0
  %245 = vdwg.mxu0
  %v246 = vadd.f32 %v68, %v217
  %v247 = vxor.u32 %v246, 2147483648
  %v248 = vmul.f32 %v247, 1.442695
  %v249 = vpow.pop %v248
  %v250 = vadd.f32 %v249, 1.0
  %v251 = vrcp.pop %v250
  %v252 = vmul.f32 %v250, %v251
  %v253 = vsub.f32 1.0, %v252
  %v254 = vmul.f32 %v251, %v253
  %v255 = vadd.f32 %v251, %v254
  %vm256 = vweird.f32 %v250
  %vm257 = vweird.f32 %v251
  %vm258 = vmor %vm256, %vm257
  %v259 = vsel %vm258, %v251, %v255
  %v260 = vand.u32 2147483647, %v250
  %vm261 = vcmp.eq.f32.partialorder %v260, 8.507059e+37
  %v262 = vand.u32 %v250, 2147483648
  %v263 = vor.u32 1.1754944e-38, %v262
  %v264 = vsel %vm261, %v263, %v259
  %v265 = vmul.f32 1.0, %v264
  %v266 = vadd.f32 %v69, %v230
  %v267 = vxor.u32 %v266, 2147483648
  %v268 = vmul.f32 %v267, 1.442695
  %v269 = vpow.pop %v268
  %v270 = vadd.f32 %v269, 1.0
  %v271 = vrcp.pop %v270
  %v272 = vmul.f32 %v270, %v271
  %v273 = vsub.f32 1.0, %v272
  %v274 = vmul.f32 %v271, %v273
  %v275 = vadd.f32 %v271, %v274
  %vm276 = vweird.f32 %v270
  %vm277 = vweird.f32 %v271
  %vm278 = vmor %vm276, %vm277
  %v279 = vsel %vm278, %v271, %v275
  %v280 = vand.u32 2147483647, %v270
  %vm281 = vcmp.eq.f32.partialorder %v280, 8.507059e+37
  %v282 = vand.u32 %v270, 2147483648
  %v283 = vor.u32 1.1754944e-38, %v282
  %v284 = vsel %vm281, %v283, %v279
  %v285 = vmul.f32 1.0, %v284
  %v286 = vmul.f32 %v265, %v243
  %v287 = vadd.f32 %v70, %v286
  %v288 = vtanh.pop %v287
  %v289 = vsub.f32 1.0, %v285
  %v290 = vmul.f32 %v289, %v288
  %v291 = vmul.f32 %v285, %v65
  %v292 = vadd.f32 %v290, %v291
  %v293 = vstv %s64
  %vm294 = vcmp.lt.s32.totalorder %v293, %v63
  %v295 = vsel %vm294, 1, 0
  %296 = vset.pattern.permute.xlu0 0
  %297 = vperm.xlu0 %296, %v295
  %v298 = vpop.permute.xlu0 %297
  %vm299 = vcmp.eq.s32.totalorder %v298, 1
  %v300 = vsel %vm299, %v292, %v65
  %s301 = scalar_lea.vmem %s1, 12
  %v302 = vld [vmem:[%s301] sm:$0xff]
  %v303 = vld [vmem:[%s301 + $0x8] sm:$0xf]
  %v304 = vunpack.c.l.bf16 %v302
  %v305 = vunpack.c.h.bf16 %v302
  %v306 = vunpack.c.l.bf16 %v303
  %v307 = vpack.c.bf16 %v300, %v300
  %308 = vmatpush.bf16.msra.mxu0 %v180
  %309 = vmatpush.bf16.msra.mxu0 %v177
  %310 = vmatpush.bf16.msra.mxu0 %v174
  %311 = vmatpush.bf16.msra.mxu0 %v171
  %312 = vmatpush.bf16.msra.mxu0 %v168
  %313 = vmatpush.bf16.msra.mxu0 %v165
  %314 = vmatpush.bf16.msra.mxu0 %v162
  %315 = vmatpush.bf16.msra.mxu0 %v159
  %316 = vmatmul.bf16.gmra.mxu0 %v307
  %v317 = vpop.f32.mrf.mxu0
  %v318 = vadd.f32 %v73, %v317
  %v319 = vpop.f32.mrf.mxu0
  %320 = vdwg.mxu0
  %321 = vmatpush.bf16.msra.mxu0 %v181
  %322 = vmatpush.bf16.msra.mxu0 %v178
  %323 = vmatpush.bf16.msra.mxu0 %v175
  %324 = vmatpush.bf16.msra.mxu0 %v172
  %325 = vmatpush.bf16.msra.mxu0 %v169
  %326 = vmatpush.bf16.msra.mxu0 %v166
  %327 = vmatpush.bf16.msra.mxu0 %v163
  %328 = vmatpush.bf16.msra.mxu0 %v160
  %329 = vmatmul.bf16.gmra.mxu0 %v307
  %v330 = vpop.f32.mrf.mxu0
  %v331 = vadd.f32 %v74, %v330
  %v332 = vpop.f32.mrf.mxu0
  %333 = vdwg.mxu0
  %334 = vmatpush.bf16.msra.mxu0 %v182
  %335 = vmatpush.bf16.msra.mxu0 %v179
  %336 = vmatpush.bf16.msra.mxu0 %v176
  %337 = vmatpush.bf16.msra.mxu0 %v173
  %338 = vmatpush.bf16.msra.mxu0 %v170
  %339 = vmatpush.bf16.msra.mxu0 %v167
  %340 = vmatpush.bf16.msra.mxu0 %v164
  %341 = vmatpush.bf16.msra.mxu0 %v161
  %342 = vmatmul.bf16.gmra.mxu0 %v307
  %v343 = vpop.f32.mrf.mxu0
  %v344 = vadd.f32 %v75, %v343
  %v345 = vpop.f32.mrf.mxu0
  %346 = vdwg.mxu0
  %v347 = vadd.f32 %v304, %v318
  %v348 = vxor.u32 %v347, 2147483648
  %v349 = vmul.f32 %v348, 1.442695
  %v350 = vpow.pop %v349
  %v351 = vadd.f32 %v350, 1.0
  %v352 = vrcp.pop %v351
  %v353 = vmul.f32 %v351, %v352
  %v354 = vsub.f32 1.0, %v353
  %v355 = vmul.f32 %v352, %v354
  %v356 = vadd.f32 %v352, %v355
  %vm357 = vweird.f32 %v351
  %vm358 = vweird.f32 %v352
  %vm359 = vmor %vm357, %vm358
  %v360 = vsel %vm359, %v352, %v356
  %v361 = vand.u32 2147483647, %v351
  %vm362 = vcmp.eq.f32.partialorder %v361, 8.507059e+37
  %v363 = vand.u32 %v351, 2147483648
  %v364 = vor.u32 1.1754944e-38, %v363
  %v365 = vsel %vm362, %v364, %v360
  %v366 = vmul.f32 1.0, %v365
  %v367 = vadd.f32 %v305, %v331
  %v368 = vxor.u32 %v367, 2147483648
  %v369 = vmul.f32 %v368, 1.442695
  %v370 = vpow.pop %v369
  %v371 = vadd.f32 %v370, 1.0
  %v372 = vrcp.pop %v371
  %v373 = vmul.f32 %v371, %v372
  %v374 = vsub.f32 1.0, %v373
  %v375 = vmul.f32 %v372, %v374
  %v376 = vadd.f32 %v372, %v375
  %vm377 = vweird.f32 %v371
  %vm378 = vweird.f32 %v372
  %vm379 = vmor %vm377, %vm378
  %v380 = vsel %vm379, %v372, %v376
  %v381 = vand.u32 2147483647, %v371
  %vm382 = vcmp.eq.f32.partialorder %v381, 8.507059e+37
  %v383 = vand.u32 %v371, 2147483648
  %v384 = vor.u32 1.1754944e-38, %v383
  %v385 = vsel %vm382, %v384, %v380
  %v386 = vmul.f32 1.0, %v385
  %v387 = vmul.f32 %v366, %v344
  %v388 = vadd.f32 %v306, %v387
  %v389 = vtanh.pop %v388
  %v390 = vsub.f32 1.0, %v386
  %v391 = vmul.f32 %v390, %v389
  %v392 = vmul.f32 %v386, %v300
  %v393 = vadd.f32 %v391, %v392
  %s394 = sadd.s32 %s64, 1
  %v395 = vstv %s394
  %vm396 = vcmp.lt.s32.totalorder %v395, %v63
  %v397 = vsel %vm396, 1, 0
  %398 = vset.pattern.permute.xlu0 0
  %399 = vperm.xlu0 %398, %v397
  %v400 = vpop.permute.xlu0 %399
  %vm401 = vcmp.eq.s32.totalorder %v400, 1
  %v402 = vsel %vm401, %v393, %v300
  %s403 = scalar_lea.vmem %s1, 24
  %v404 = vld [vmem:[%s403] sm:$0xff]
  %v405 = vld [vmem:[%s403 + $0x8] sm:$0xf]
  %v406 = vunpack.c.l.bf16 %v404
  %v407 = vunpack.c.h.bf16 %v404
  %v408 = vunpack.c.l.bf16 %v405
  %v409 = vpack.c.bf16 %v402, %v402
  %410 = vmatpush.bf16.msra.mxu0 %v180
  %411 = vmatpush.bf16.msra.mxu0 %v177
  %412 = vmatpush.bf16.msra.mxu0 %v174
  %413 = vmatpush.bf16.msra.mxu0 %v171
  %414 = vmatpush.bf16.msra.mxu0 %v168
  %415 = vmatpush.bf16.msra.mxu0 %v165
  %416 = vmatpush.bf16.msra.mxu0 %v162
  %417 = vmatpush.bf16.msra.mxu0 %v159
  %418 = vmatmul.bf16.gmra.mxu0 %v409
  %v419 = vpop.f32.mrf.mxu0
  %v420 = vadd.f32 %v73, %v419
  %v421 = vpop.f32.mrf.mxu0
  %422 = vdwg.mxu0
  %423 = vmatpush.bf16.msra.mxu0 %v181
  %424 = vmatpush.bf16.msra.mxu0 %v178
  %425 = vmatpush.bf16.msra.mxu0 %v175
  %426 = vmatpush.bf16.msra.mxu0 %v172
  %427 = vmatpush.bf16.msra.mxu0 %v169
  %428 = vmatpush.bf16.msra.mxu0 %v166
  %429 = vmatpush.bf16.msra.mxu0 %v163
  %430 = vmatpush.bf16.msra.mxu0 %v160
  %431 = vmatmul.bf16.gmra.mxu0 %v409
  %v432 = vpop.f32.mrf.mxu0
  %v433 = vadd.f32 %v74, %v432
  %v434 = vpop.f32.mrf.mxu0
  %435 = vdwg.mxu0
  %436 = vmatpush.bf16.msra.mxu0 %v182
  %437 = vmatpush.bf16.msra.mxu0 %v179
  %438 = vmatpush.bf16.msra.mxu0 %v176
  %439 = vmatpush.bf16.msra.mxu0 %v173
  %440 = vmatpush.bf16.msra.mxu0 %v170
  %441 = vmatpush.bf16.msra.mxu0 %v167
  %442 = vmatpush.bf16.msra.mxu0 %v164
  %443 = vmatpush.bf16.msra.mxu0 %v161
  %444 = vmatmul.bf16.gmra.mxu0 %v409
  %v445 = vpop.f32.mrf.mxu0
  %v446 = vadd.f32 %v75, %v445
  %v447 = vpop.f32.mrf.mxu0
  %448 = vdwg.mxu0
  %v449 = vadd.f32 %v406, %v420
  %v450 = vxor.u32 %v449, 2147483648
  %v451 = vmul.f32 %v450, 1.442695
  %v452 = vpow.pop %v451
  %v453 = vadd.f32 %v452, 1.0
  %v454 = vrcp.pop %v453
  %v455 = vmul.f32 %v453, %v454
  %v456 = vsub.f32 1.0, %v455
  %v457 = vmul.f32 %v454, %v456
  %v458 = vadd.f32 %v454, %v457
  %vm459 = vweird.f32 %v453
  %vm460 = vweird.f32 %v454
  %vm461 = vmor %vm459, %vm460
  %v462 = vsel %vm461, %v454, %v458
  %v463 = vand.u32 2147483647, %v453
  %vm464 = vcmp.eq.f32.partialorder %v463, 8.507059e+37
  %v465 = vand.u32 %v453, 2147483648
  %v466 = vor.u32 1.1754944e-38, %v465
  %v467 = vsel %vm464, %v466, %v462
  %v468 = vmul.f32 1.0, %v467
  %v469 = vadd.f32 %v407, %v433
  %v470 = vxor.u32 %v469, 2147483648
  %v471 = vmul.f32 %v470, 1.442695
  %v472 = vpow.pop %v471
  %v473 = vadd.f32 %v472, 1.0
  %v474 = vrcp.pop %v473
  %v475 = vmul.f32 %v473, %v474
  %v476 = vsub.f32 1.0, %v475
  %v477 = vmul.f32 %v474, %v476
  %v478 = vadd.f32 %v474, %v477
  %vm479 = vweird.f32 %v473
  %vm480 = vweird.f32 %v474
  %vm481 = vmor %vm479, %vm480
  %v482 = vsel %vm481, %v474, %v478
  %v483 = vand.u32 2147483647, %v473
  %vm484 = vcmp.eq.f32.partialorder %v483, 8.507059e+37
  %v485 = vand.u32 %v473, 2147483648
  %v486 = vor.u32 1.1754944e-38, %v485
  %v487 = vsel %vm484, %v486, %v482
  %v488 = vmul.f32 1.0, %v487
  %v489 = vmul.f32 %v468, %v446
  %v490 = vadd.f32 %v408, %v489
  %v491 = vtanh.pop %v490
  %v492 = vsub.f32 1.0, %v488
  %v493 = vmul.f32 %v492, %v491
  %v494 = vmul.f32 %v488, %v402
  %v495 = vadd.f32 %v493, %v494
  %s496 = sadd.s32 %s64, 2
  %v497 = vstv %s496
  %vm498 = vcmp.lt.s32.totalorder %v497, %v63
  %v499 = vsel %vm498, 1, 0
  %500 = vset.pattern.permute.xlu0 0
  %501 = vperm.xlu0 %500, %v499
  %v502 = vpop.permute.xlu0 %501
  %vm503 = vcmp.eq.s32.totalorder %v502, 1
  %v504 = vsel %vm503, %v495, %v402
  %s505 = scalar_lea.vmem %s1, 36
  %v506 = vld [vmem:[%s505] sm:$0xff]
  %v507 = vld [vmem:[%s505 + $0x8] sm:$0xf]
  %v508 = vunpack.c.l.bf16 %v506
  %v509 = vunpack.c.h.bf16 %v506
  %v510 = vunpack.c.l.bf16 %v507
  %v511 = vpack.c.bf16 %v504, %v504
  %512 = vmatpush.bf16.msra.mxu0 %v180
  %513 = vmatpush.bf16.msra.mxu0 %v177
  %514 = vmatpush.bf16.msra.mxu0 %v174
  %515 = vmatpush.bf16.msra.mxu0 %v171
  %516 = vmatpush.bf16.msra.mxu0 %v168
  %517 = vmatpush.bf16.msra.mxu0 %v165
  %518 = vmatpush.bf16.msra.mxu0 %v162
  %519 = vmatpush.bf16.msra.mxu0 %v159
  %520 = vmatmul.bf16.gmra.mxu0 %v511
  %v521 = vpop.f32.mrf.mxu0
  %v522 = vadd.f32 %v73, %v521
  %v523 = vpop.f32.mrf.mxu0
  %524 = vdwg.mxu0
  %525 = vmatpush.bf16.msra.mxu0 %v181
  %526 = vmatpush.bf16.msra.mxu0 %v178
  %527 = vmatpush.bf16.msra.mxu0 %v175
  %528 = vmatpush.bf16.msra.mxu0 %v172
  %529 = vmatpush.bf16.msra.mxu0 %v169
  %530 = vmatpush.bf16.msra.mxu0 %v166
  %531 = vmatpush.bf16.msra.mxu0 %v163
  %532 = vmatpush.bf16.msra.mxu0 %v160
  %533 = vmatmul.bf16.gmra.mxu0 %v511
  %v534 = vpop.f32.mrf.mxu0
  %v535 = vadd.f32 %v74, %v534
  %v536 = vpop.f32.mrf.mxu0
  %537 = vdwg.mxu0
  %538 = vmatpush.bf16.msra.mxu0 %v182
  %539 = vmatpush.bf16.msra.mxu0 %v179
  %540 = vmatpush.bf16.msra.mxu0 %v176
  %541 = vmatpush.bf16.msra.mxu0 %v173
  %542 = vmatpush.bf16.msra.mxu0 %v170
  %543 = vmatpush.bf16.msra.mxu0 %v167
  %544 = vmatpush.bf16.msra.mxu0 %v164
  %545 = vmatpush.bf16.msra.mxu0 %v161
  %546 = vmatmul.bf16.gmra.mxu0 %v511
  %v547 = vpop.f32.mrf.mxu0
  %v548 = vadd.f32 %v75, %v547
  %v549 = vpop.f32.mrf.mxu0
  %550 = vdwg.mxu0
  %v551 = vadd.f32 %v508, %v522
  %v552 = vxor.u32 %v551, 2147483648
  %v553 = vmul.f32 %v552, 1.442695
  %v554 = vpow.pop %v553
  %v555 = vadd.f32 %v554, 1.0
  %v556 = vrcp.pop %v555
  %v557 = vmul.f32 %v555, %v556
  %v558 = vsub.f32 1.0, %v557
  %v559 = vmul.f32 %v556, %v558
  %v560 = vadd.f32 %v556, %v559
  %vm561 = vweird.f32 %v555
  %vm562 = vweird.f32 %v556
  %vm563 = vmor %vm561, %vm562
  %v564 = vsel %vm563, %v556, %v560
  %v565 = vand.u32 2147483647, %v555
  %vm566 = vcmp.eq.f32.partialorder %v565, 8.507059e+37
  %v567 = vand.u32 %v555, 2147483648
  %v568 = vor.u32 1.1754944e-38, %v567
  %v569 = vsel %vm566, %v568, %v564
  %v570 = vmul.f32 1.0, %v569
  %v571 = vadd.f32 %v509, %v535
  %v572 = vxor.u32 %v571, 2147483648
  %v573 = vmul.f32 %v572, 1.442695
  %v574 = vpow.pop %v573
  %v575 = vadd.f32 %v574, 1.0
  %v576 = vrcp.pop %v575
  %v577 = vmul.f32 %v575, %v576
  %v578 = vsub.f32 1.0, %v577
  %v579 = vmul.f32 %v576, %v578
  %v580 = vadd.f32 %v576, %v579
  %vm581 = vweird.f32 %v575
  %vm582 = vweird.f32 %v576
  %vm583 = vmor %vm581, %vm582
  %v584 = vsel %vm583, %v576, %v580
  %v585 = vand.u32 2147483647, %v575
  %vm586 = vcmp.eq.f32.partialorder %v585, 8.507059e+37
  %v587 = vand.u32 %v575, 2147483648
  %v588 = vor.u32 1.1754944e-38, %v587
  %v589 = vsel %vm586, %v588, %v584
  %v590 = vmul.f32 1.0, %v589
  %v591 = vmul.f32 %v570, %v548
  %v592 = vadd.f32 %v510, %v591
  %v593 = vtanh.pop %v592
  %v594 = vsub.f32 1.0, %v590
  %v595 = vmul.f32 %v594, %v593
  %v596 = vmul.f32 %v590, %v504
  %v597 = vadd.f32 %v595, %v596
  %s598 = sadd.s32 %s64, 3
  %v599 = vstv %s598
  %vm600 = vcmp.lt.s32.totalorder %v599, %v63
  %v601 = vsel %vm600, 1, 0
  %602 = vset.pattern.permute.xlu0 0
  %603 = vperm.xlu0 %602, %v601
  %v604 = vpop.permute.xlu0 %603
  %vm605 = vcmp.eq.s32.totalorder %v604, 1
  %v606 = vsel %vm605, %v597, %v504
  %s607 = scalar_lea.vmem %s1, 48
  %v608 = vld [vmem:[%s607] sm:$0xff]
  %v609 = vld [vmem:[%s607 + $0x8] sm:$0xf]
  %v610 = vunpack.c.l.bf16 %v608
  %v611 = vunpack.c.h.bf16 %v608
  %v612 = vunpack.c.l.bf16 %v609
  %v613 = vpack.c.bf16 %v606, %v606
  %614 = vmatpush.bf16.msra.mxu0 %v180
  %615 = vmatpush.bf16.msra.mxu0 %v177
  %616 = vmatpush.bf16.msra.mxu0 %v174
  %617 = vmatpush.bf16.msra.mxu0 %v171
  %618 = vmatpush.bf16.msra.mxu0 %v168
  %619 = vmatpush.bf16.msra.mxu0 %v165
  %620 = vmatpush.bf16.msra.mxu0 %v162
  %621 = vmatpush.bf16.msra.mxu0 %v159
  %622 = vmatmul.bf16.gmra.mxu0 %v613
  %v623 = vpop.f32.mrf.mxu0
  %v624 = vadd.f32 %v73, %v623
  %v625 = vpop.f32.mrf.mxu0
  %626 = vdwg.mxu0
  %627 = vmatpush.bf16.msra.mxu0 %v181
  %628 = vmatpush.bf16.msra.mxu0 %v178
  %629 = vmatpush.bf16.msra.mxu0 %v175
  %630 = vmatpush.bf16.msra.mxu0 %v172
  %631 = vmatpush.bf16.msra.mxu0 %v169
  %632 = vmatpush.bf16.msra.mxu0 %v166
  %633 = vmatpush.bf16.msra.mxu0 %v163
  %634 = vmatpush.bf16.msra.mxu0 %v160
  %635 = vmatmul.bf16.gmra.mxu0 %v613
  %v636 = vpop.f32.mrf.mxu0
  %v637 = vadd.f32 %v74, %v636
  %v638 = vpop.f32.mrf.mxu0
  %639 = vdwg.mxu0
  %640 = vmatpush.bf16.msra.mxu0 %v182
  %641 = vmatpush.bf16.msra.mxu0 %v179
  %642 = vmatpush.bf16.msra.mxu0 %v176
  %643 = vmatpush.bf16.msra.mxu0 %v173
  %644 = vmatpush.bf16.msra.mxu0 %v170
  %645 = vmatpush.bf16.msra.mxu0 %v167
  %646 = vmatpush.bf16.msra.mxu0 %v164
  %647 = vmatpush.bf16.msra.mxu0 %v161
  %648 = vmatmul.bf16.gmra.mxu0 %v613
  %v649 = vpop.f32.mrf.mxu0
  %v650 = vadd.f32 %v75, %v649
  %v651 = vpop.f32.mrf.mxu0
  %652 = vdwg.mxu0
  %v653 = vadd.f32 %v610, %v624
  %v654 = vxor.u32 %v653, 2147483648
  %v655 = vmul.f32 %v654, 1.442695
  %v656 = vpow.pop %v655
  %v657 = vadd.f32 %v656, 1.0
  %v658 = vrcp.pop %v657
  %v659 = vmul.f32 %v657, %v658
  %v660 = vsub.f32 1.0, %v659
  %v661 = vmul.f32 %v658, %v660
  %v662 = vadd.f32 %v658, %v661
  %vm663 = vweird.f32 %v657
  %vm664 = vweird.f32 %v658
  %vm665 = vmor %vm663, %vm664
  %v666 = vsel %vm665, %v658, %v662
  %v667 = vand.u32 2147483647, %v657
  %vm668 = vcmp.eq.f32.partialorder %v667, 8.507059e+37
  %v669 = vand.u32 %v657, 2147483648
  %v670 = vor.u32 1.1754944e-38, %v669
  %v671 = vsel %vm668, %v670, %v666
  %v672 = vmul.f32 1.0, %v671
  %v673 = vadd.f32 %v611, %v637
  %v674 = vxor.u32 %v673, 2147483648
  %v675 = vmul.f32 %v674, 1.442695
  %v676 = vpow.pop %v675
  %v677 = vadd.f32 %v676, 1.0
  %v678 = vrcp.pop %v677
  %v679 = vmul.f32 %v677, %v678
  %v680 = vsub.f32 1.0, %v679
  %v681 = vmul.f32 %v678, %v680
  %v682 = vadd.f32 %v678, %v681
  %vm683 = vweird.f32 %v677
  %vm684 = vweird.f32 %v678
  %vm685 = vmor %vm683, %vm684
  %v686 = vsel %vm685, %v678, %v682
  %v687 = vand.u32 2147483647, %v677
  %vm688 = vcmp.eq.f32.partialorder %v687, 8.507059e+37
  %v689 = vand.u32 %v677, 2147483648
  %v690 = vor.u32 1.1754944e-38, %v689
  %v691 = vsel %vm688, %v690, %v686
  %v692 = vmul.f32 1.0, %v691
  %v693 = vmul.f32 %v672, %v650
  %v694 = vadd.f32 %v612, %v693
  %v695 = vtanh.pop %v694
  %v696 = vsub.f32 1.0, %v692
  %v697 = vmul.f32 %v696, %v695
  %v698 = vmul.f32 %v692, %v606
  %v699 = vadd.f32 %v697, %v698
  %s700 = sadd.s32 %s64, 4
  %v701 = vstv %s700
  %vm702 = vcmp.lt.s32.totalorder %v701, %v63
  %v703 = vsel %vm702, 1, 0
  %704 = vset.pattern.permute.xlu0 0
  %705 = vperm.xlu0 %704, %v703
  %v706 = vpop.permute.xlu0 %705
  %vm707 = vcmp.eq.s32.totalorder %v706, 1
  %v708 = vsel %vm707, %v699, %v606
  %s709 = scalar_lea.vmem %s1, 60
  %v710 = vld [vmem:[%s709] sm:$0xff]
  %v711 = vld [vmem:[%s709 + $0x8] sm:$0xf]
  %v712 = vunpack.c.l.bf16 %v710
  %v713 = vunpack.c.h.bf16 %v710
  %v714 = vunpack.c.l.bf16 %v711
  %v715 = vpack.c.bf16 %v708, %v708
  %716 = vmatpush.bf16.msra.mxu0 %v180
  %717 = vmatpush.bf16.msra.mxu0 %v177
  %718 = vmatpush.bf16.msra.mxu0 %v174
  %719 = vmatpush.bf16.msra.mxu0 %v171
  %720 = vmatpush.bf16.msra.mxu0 %v168
  %721 = vmatpush.bf16.msra.mxu0 %v165
  %722 = vmatpush.bf16.msra.mxu0 %v162
  %723 = vmatpush.bf16.msra.mxu0 %v159
  %724 = vmatmul.bf16.gmra.mxu0 %v715
  %v725 = vpop.f32.mrf.mxu0
  %v726 = vadd.f32 %v73, %v725
  %v727 = vpop.f32.mrf.mxu0
  %728 = vdwg.mxu0
  %729 = vmatpush.bf16.msra.mxu0 %v181
  %730 = vmatpush.bf16.msra.mxu0 %v178
  %731 = vmatpush.bf16.msra.mxu0 %v175
  %732 = vmatpush.bf16.msra.mxu0 %v172
  %733 = vmatpush.bf16.msra.mxu0 %v169
  %734 = vmatpush.bf16.msra.mxu0 %v166
  %735 = vmatpush.bf16.msra.mxu0 %v163
  %736 = vmatpush.bf16.msra.mxu0 %v160
  %737 = vmatmul.bf16.gmra.mxu0 %v715
  %v738 = vpop.f32.mrf.mxu0
  %v739 = vadd.f32 %v74, %v738
  %v740 = vpop.f32.mrf.mxu0
  %741 = vdwg.mxu0
  %742 = vmatpush.bf16.msra.mxu0 %v182
  %743 = vmatpush.bf16.msra.mxu0 %v179
  %744 = vmatpush.bf16.msra.mxu0 %v176
  %745 = vmatpush.bf16.msra.mxu0 %v173
  %746 = vmatpush.bf16.msra.mxu0 %v170
  %747 = vmatpush.bf16.msra.mxu0 %v167
  %748 = vmatpush.bf16.msra.mxu0 %v164
  %749 = vmatpush.bf16.msra.mxu0 %v161
  %750 = vmatmul.bf16.gmra.mxu0 %v715
  %v751 = vpop.f32.mrf.mxu0
  %v752 = vadd.f32 %v75, %v751
  %v753 = vpop.f32.mrf.mxu0
  %754 = vdwg.mxu0
  %v755 = vadd.f32 %v712, %v726
  %v756 = vxor.u32 %v755, 2147483648
  %v757 = vmul.f32 %v756, 1.442695
  %v758 = vpow.pop %v757
  %v759 = vadd.f32 %v758, 1.0
  %v760 = vrcp.pop %v759
  %v761 = vmul.f32 %v759, %v760
  %v762 = vsub.f32 1.0, %v761
  %v763 = vmul.f32 %v760, %v762
  %v764 = vadd.f32 %v760, %v763
  %vm765 = vweird.f32 %v759
  %vm766 = vweird.f32 %v760
  %vm767 = vmor %vm765, %vm766
  %v768 = vsel %vm767, %v760, %v764
  %v769 = vand.u32 2147483647, %v759
  %vm770 = vcmp.eq.f32.partialorder %v769, 8.507059e+37
  %v771 = vand.u32 %v759, 2147483648
  %v772 = vor.u32 1.1754944e-38, %v771
  %v773 = vsel %vm770, %v772, %v768
  %v774 = vmul.f32 1.0, %v773
  %v775 = vadd.f32 %v713, %v739
  %v776 = vxor.u32 %v775, 2147483648
  %v777 = vmul.f32 %v776, 1.442695
  %v778 = vpow.pop %v777
  %v779 = vadd.f32 %v778, 1.0
  %v780 = vrcp.pop %v779
  %v781 = vmul.f32 %v779, %v780
  %v782 = vsub.f32 1.0, %v781
  %v783 = vmul.f32 %v780, %v782
  %v784 = vadd.f32 %v780, %v783
  %vm785 = vweird.f32 %v779
  %vm786 = vweird.f32 %v780
  %vm787 = vmor %vm785, %vm786
  %v788 = vsel %vm787, %v780, %v784
  %v789 = vand.u32 2147483647, %v779
  %vm790 = vcmp.eq.f32.partialorder %v789, 8.507059e+37
  %v791 = vand.u32 %v779, 2147483648
  %v792 = vor.u32 1.1754944e-38, %v791
  %v793 = vsel %vm790, %v792, %v788
  %v794 = vmul.f32 1.0, %v793
  %v795 = vmul.f32 %v774, %v752
  %v796 = vadd.f32 %v714, %v795
  %v797 = vtanh.pop %v796
  %v798 = vsub.f32 1.0, %v794
  %v799 = vmul.f32 %v798, %v797
  %v800 = vmul.f32 %v794, %v708
  %v801 = vadd.f32 %v799, %v800
  %s802 = sadd.s32 %s64, 5
  %v803 = vstv %s802
  %vm804 = vcmp.lt.s32.totalorder %v803, %v63
  %v805 = vsel %vm804, 1, 0
  %806 = vset.pattern.permute.xlu0 0
  %807 = vperm.xlu0 %806, %v805
  %v808 = vpop.permute.xlu0 %807
  %vm809 = vcmp.eq.s32.totalorder %v808, 1
  %v810 = vsel %vm809, %v801, %v708
  %s811 = scalar_lea.vmem %s1, 72
  %v812 = vld [vmem:[%s811] sm:$0xff]
  %v813 = vld [vmem:[%s811 + $0x8] sm:$0xf]
  %v814 = vunpack.c.l.bf16 %v812
  %v815 = vunpack.c.h.bf16 %v812
  %v816 = vunpack.c.l.bf16 %v813
  %v817 = vpack.c.bf16 %v810, %v810
  %818 = vmatpush.bf16.msra.mxu0 %v180
  %819 = vmatpush.bf16.msra.mxu0 %v177
  %820 = vmatpush.bf16.msra.mxu0 %v174
  %821 = vmatpush.bf16.msra.mxu0 %v171
  %822 = vmatpush.bf16.msra.mxu0 %v168
  %823 = vmatpush.bf16.msra.mxu0 %v165
  %824 = vmatpush.bf16.msra.mxu0 %v162
  %825 = vmatpush.bf16.msra.mxu0 %v159
  %826 = vmatmul.bf16.gmra.mxu0 %v817
  %v827 = vpop.f32.mrf.mxu0
  %v828 = vadd.f32 %v73, %v827
  %v829 = vpop.f32.mrf.mxu0
  %830 = vdwg.mxu0
  %831 = vmatpush.bf16.msra.mxu0 %v181
  %832 = vmatpush.bf16.msra.mxu0 %v178
  %833 = vmatpush.bf16.msra.mxu0 %v175
  %834 = vmatpush.bf16.msra.mxu0 %v172
  %835 = vmatpush.bf16.msra.mxu0 %v169
  %836 = vmatpush.bf16.msra.mxu0 %v166
  %837 = vmatpush.bf16.msra.mxu0 %v163
  %838 = vmatpush.bf16.msra.mxu0 %v160
  %839 = vmatmul.bf16.gmra.mxu0 %v817
  %v840 = vpop.f32.mrf.mxu0
  %v841 = vadd.f32 %v74, %v840
  %v842 = vpop.f32.mrf.mxu0
  %843 = vdwg.mxu0
  %844 = vmatpush.bf16.msra.mxu0 %v182
  %845 = vmatpush.bf16.msra.mxu0 %v179
  %846 = vmatpush.bf16.msra.mxu0 %v176
  %847 = vmatpush.bf16.msra.mxu0 %v173
  %848 = vmatpush.bf16.msra.mxu0 %v170
  %849 = vmatpush.bf16.msra.mxu0 %v167
  %850 = vmatpush.bf16.msra.mxu0 %v164
  %851 = vmatpush.bf16.msra.mxu0 %v161
  %852 = vmatmul.bf16.gmra.mxu0 %v817
  %v853 = vpop.f32.mrf.mxu0
  %v854 = vadd.f32 %v75, %v853
  %v855 = vpop.f32.mrf.mxu0
  %856 = vdwg.mxu0
  %v857 = vadd.f32 %v814, %v828
  %v858 = vxor.u32 %v857, 2147483648
  %v859 = vmul.f32 %v858, 1.442695
  %v860 = vpow.pop %v859
  %v861 = vadd.f32 %v860, 1.0
  %v862 = vrcp.pop %v861
  %v863 = vmul.f32 %v861, %v862
  %v864 = vsub.f32 1.0, %v863
  %v865 = vmul.f32 %v862, %v864
  %v866 = vadd.f32 %v862, %v865
  %vm867 = vweird.f32 %v861
  %vm868 = vweird.f32 %v862
  %vm869 = vmor %vm867, %vm868
  %v870 = vsel %vm869, %v862, %v866
  %v871 = vand.u32 2147483647, %v861
  %vm872 = vcmp.eq.f32.partialorder %v871, 8.507059e+37
  %v873 = vand.u32 %v861, 2147483648
  %v874 = vor.u32 1.1754944e-38, %v873
  %v875 = vsel %vm872, %v874, %v870
  %v876 = vmul.f32 1.0, %v875
  %v877 = vadd.f32 %v815, %v841
  %v878 = vxor.u32 %v877, 2147483648
  %v879 = vmul.f32 %v878, 1.442695
  %v880 = vpow.pop %v879
  %v881 = vadd.f32 %v880, 1.0
  %v882 = vrcp.pop %v881
  %v883 = vmul.f32 %v881, %v882
  %v884 = vsub.f32 1.0, %v883
  %v885 = vmul.f32 %v882, %v884
  %v886 = vadd.f32 %v882, %v885
  %vm887 = vweird.f32 %v881
  %vm888 = vweird.f32 %v882
  %vm889 = vmor %vm887, %vm888
  %v890 = vsel %vm889, %v882, %v886
  %v891 = vand.u32 2147483647, %v881
  %vm892 = vcmp.eq.f32.partialorder %v891, 8.507059e+37
  %v893 = vand.u32 %v881, 2147483648
  %v894 = vor.u32 1.1754944e-38, %v893
  %v895 = vsel %vm892, %v894, %v890
  %v896 = vmul.f32 1.0, %v895
  %v897 = vmul.f32 %v876, %v854
  %v898 = vadd.f32 %v816, %v897
  %v899 = vtanh.pop %v898
  %v900 = vsub.f32 1.0, %v896
  %v901 = vmul.f32 %v900, %v899
  %v902 = vmul.f32 %v896, %v810
  %v903 = vadd.f32 %v901, %v902
  %s904 = sadd.s32 %s64, 6
  %v905 = vstv %s904
  %vm906 = vcmp.lt.s32.totalorder %v905, %v63
  %v907 = vsel %vm906, 1, 0
  %908 = vset.pattern.permute.xlu0 0
  %909 = vperm.xlu0 %908, %v907
  %v910 = vpop.permute.xlu0 %909
  %vm911 = vcmp.eq.s32.totalorder %v910, 1
  %v912 = vsel %vm911, %v903, %v810
  %s913 = scalar_lea.vmem %s1, 84
  %v914 = vld [vmem:[%s913] sm:$0xff]
  %v915 = vld [vmem:[%s913 + $0x8] sm:$0xf]
  %v916 = vunpack.c.l.bf16 %v914
  %v917 = vunpack.c.h.bf16 %v914
  %v918 = vunpack.c.l.bf16 %v915
  %v919 = vpack.c.bf16 %v912, %v912
  %920 = vmatpush.bf16.msra.mxu0 %v180
  %921 = vmatpush.bf16.msra.mxu0 %v177
  %922 = vmatpush.bf16.msra.mxu0 %v174
  %923 = vmatpush.bf16.msra.mxu0 %v171
  %924 = vmatpush.bf16.msra.mxu0 %v168
  %925 = vmatpush.bf16.msra.mxu0 %v165
  %926 = vmatpush.bf16.msra.mxu0 %v162
  %927 = vmatpush.bf16.msra.mxu0 %v159
  %928 = vmatmul.bf16.gmra.mxu0 %v919
  %v929 = vpop.f32.mrf.mxu0
  %v930 = vadd.f32 %v73, %v929
  %v931 = vpop.f32.mrf.mxu0
  %932 = vdwg.mxu0
  %933 = vmatpush.bf16.msra.mxu0 %v181
  %934 = vmatpush.bf16.msra.mxu0 %v178
  %935 = vmatpush.bf16.msra.mxu0 %v175
  %936 = vmatpush.bf16.msra.mxu0 %v172
  %937 = vmatpush.bf16.msra.mxu0 %v169
  %938 = vmatpush.bf16.msra.mxu0 %v166
  %939 = vmatpush.bf16.msra.mxu0 %v163
  %940 = vmatpush.bf16.msra.mxu0 %v160
  %941 = vmatmul.bf16.gmra.mxu0 %v919
  %v942 = vpop.f32.mrf.mxu0
  %v943 = vadd.f32 %v74, %v942
  %v944 = vpop.f32.mrf.mxu0
  %945 = vdwg.mxu0
  %946 = vmatpush.bf16.msra.mxu0 %v182
  %947 = vmatpush.bf16.msra.mxu0 %v179
  %948 = vmatpush.bf16.msra.mxu0 %v176
  %949 = vmatpush.bf16.msra.mxu0 %v173
  %950 = vmatpush.bf16.msra.mxu0 %v170
  %951 = vmatpush.bf16.msra.mxu0 %v167
  %952 = vmatpush.bf16.msra.mxu0 %v164
  %953 = vmatpush.bf16.msra.mxu0 %v161
  %954 = vmatmul.bf16.gmra.mxu0 %v919
  %v955 = vpop.f32.mrf.mxu0
  %v956 = vadd.f32 %v75, %v955
  %v957 = vpop.f32.mrf.mxu0
  %958 = vdwg.mxu0
  %v959 = vadd.f32 %v916, %v930
  %v960 = vxor.u32 %v959, 2147483648
  %v961 = vmul.f32 %v960, 1.442695
  %v962 = vpow.pop %v961
  %v963 = vadd.f32 %v962, 1.0
  %v964 = vrcp.pop %v963
  %v965 = vmul.f32 %v963, %v964
  %v966 = vsub.f32 1.0, %v965
  %v967 = vmul.f32 %v964, %v966
  %v968 = vadd.f32 %v964, %v967
  %vm969 = vweird.f32 %v963
  %vm970 = vweird.f32 %v964
  %vm971 = vmor %vm969, %vm970
  %v972 = vsel %vm971, %v964, %v968
  %v973 = vand.u32 2147483647, %v963
  %vm974 = vcmp.eq.f32.partialorder %v973, 8.507059e+37
  %v975 = vand.u32 %v963, 2147483648
  %v976 = vor.u32 1.1754944e-38, %v975
  %v977 = vsel %vm974, %v976, %v972
  %v978 = vmul.f32 1.0, %v977
  %v979 = vadd.f32 %v917, %v943
  %v980 = vxor.u32 %v979, 2147483648
  %v981 = vmul.f32 %v980, 1.442695
  %v982 = vpow.pop %v981
  %v983 = vadd.f32 %v982, 1.0
  %v984 = vrcp.pop %v983
  %v985 = vmul.f32 %v983, %v984
  %v986 = vsub.f32 1.0, %v985
  %v987 = vmul.f32 %v984, %v986
  %v988 = vadd.f32 %v984, %v987
  %vm989 = vweird.f32 %v983
  %vm990 = vweird.f32 %v984
  %vm991 = vmor %vm989, %vm990
  %v992 = vsel %vm991, %v984, %v988
  %v993 = vand.u32 2147483647, %v983
  %vm994 = vcmp.eq.f32.partialorder %v993, 8.507059e+37
  %v995 = vand.u32 %v983, 2147483648
  %v996 = vor.u32 1.1754944e-38, %v995
  %v997 = vsel %vm994, %v996, %v992
  %v998 = vmul.f32 1.0, %v997
  %v999 = vmul.f32 %v978, %v956
  %v1000 = vadd.f32 %v918, %v999
  %v1001 = vtanh.pop %v1000
  %v1002 = vsub.f32 1.0, %v998
  %v1003 = vmul.f32 %v1002, %v1001
  %v1004 = vmul.f32 %v998, %v912
  %v1005 = vadd.f32 %v1003, %v1004
  %s1006 = sadd.s32 %s64, 7
  %v1007 = vstv %s1006
  %vm1008 = vcmp.lt.s32.totalorder %v1007, %v63
  %v1009 = vsel %vm1008, 1, 0
  %1010 = vset.pattern.permute.xlu0 0
  %1011 = vperm.xlu0 %1010, %v1009
  %v1012 = vpop.permute.xlu0 %1011
  %vm1013 = vcmp.eq.s32.totalorder %v1012, 1
  %v1014 = vsel %vm1013, %v1005, %v912
  %1015 = vst [vmem:[#allocation2] sm:$0xff] %v1014
  // Predicated region
  $region30: #{rnn_forward.1} parent=0 // pred_check
    %p1016 = pneg %p25
  $region31: #{rnn_forward.1} parent=0 // pred_check_branch
    %1018 = sbr.rel (%p1016) target = $region33
  $region32: #{rnn_forward.1} parent=0 // pred_region
    %v1019 = vld [vmem:[#allocation2] sm:$0xff]
    %v1020 = vld [vmem:[%s4] sm:$0x1]
    %v1022 = vperm.slane %v1020, 0
    %v1024 = vmul.f32 %v1019, %v1022
    %1025 = vadd.xlane.f32.xlu0 %v1024
    %v1026 = vpop.xlane.xlu0 %1025
    %v1027 = vld [vmem:[#allocation3] sm:$0x1]
    %v1029 = vperm.slane %v1027, 0
    %v1031 = vadd.f32 %v1026, %v1029
    %v1032 = vxor.u32 %v1031, 2147483648
    %v1033 = vmul.f32 %v1032, 1.442695
    %v1034 = vpow.pop %v1033
    %v1035 = vadd.f32 %v1034, 1.0
    %v1036 = vrcp.pop %v1035
    %v1037 = vmul.f32 %v1035, %v1036
    %v1038 = vsub.f32 1.0, %v1037
    %v1039 = vmul.f32 %v1036, %v1038
    %v1040 = vadd.f32 %v1036, %v1039
    %vm1041 = vweird.f32 %v1035
    %vm1042 = vweird.f32 %v1036
    %vm1043 = vmor %vm1041, %vm1042
    %v1044 = vsel %vm1043, %v1036, %v1040
    %v1045 = vand.u32 2147483647, %v1035
    %vm1046 = vcmp.eq.f32.partialorder %v1045, 8.507059e+37
    %v1047 = vand.u32 %v1035, 2147483648
    %v1048 = vor.u32 1.1754944e-38, %v1047
    %v1049 = vsel %vm1046, %v1048, %v1044
    %v1050 = vmul.f32 1.0, %v1049
    %vm1051 = vcmask 7168
    %1052 = vst.msk [vmem:[%s6] sm:$0xff] %vm1051, %v1050
  $region33: #{rnn_forward.1} parent=0 // pred_fallthru
    _
  // Predicated region
  $region34: #{rnn_forward.1} parent=0 // pred_check
    _
  $region35: #{rnn_forward.1} parent=0 // pred_check_branch
    %1054 = sbr.rel (0) target = $region37
  $region36: #{rnn_forward.1} parent=0 // pred_region
    _
  $region37: #{rnn_forward.1} parent=0 // pred_fallthru
    _
  // Predicated region
  $region38: #{rnn_forward.1} parent=0 // pred_check
    _
  $region39: #{rnn_forward.1} parent=0 // pred_check_branch
    %1056 = sbr.rel (0) target = $region41
  $region40: #{rnn_forward.1} parent=0 // pred_region
    _
  $region41: #{rnn_forward.1} parent=0 // pred_fallthru
    _

</llo_original>
